<compile_context>
chip_gen: v7x
topology: tpu7x:2x2x1
jax: 0.10.0
libtpu: 0.0.40
codegen_flags: <defaults>
</compile_context>

<pallas_src>
from functools import partial

import jax
import jax.numpy as jnp
from jax.experimental import pallas as pl
from jax.experimental.pallas import tpu as pltpu


def _fnode_kernel(num_levels, wts_ref, *refs):
    """refs = (x_main*L, x_top*L, x_bot*L, dw9, pw_scaled, bias, out)."""
    L = num_levels
    xs = refs[0:L]                 # (TH, W, C) main row tile, one per level
    tops = refs[L:2 * L]           # (W, C) row just above the tile
    bots = refs[2 * L:3 * L]       # (W, C) row just below the tile
    dw_ref, pw_ref, bias_ref, o_ref = refs[3 * L:]

    TH, W, C = xs[0].shape
    cdt = dw_ref.dtype             # compute dtype (f32; pass bf16 on v6e/v7x)

    t = pl.program_id(1)
    nt = pl.num_programs(1)

    # ---- combine (fast-attention weighted sum, weights in SMEM) + SiLU ----
    def combine_silu(parts):
        acc = parts[0][...].astype(cdt) * wts_ref[0].astype(cdt)
        for l in range(1, L):
            acc = acc + parts[l][...].astype(cdt) * wts_ref[l].astype(cdt)
        return acc * jax.nn.sigmoid(acc)

    act = combine_silu(xs)                                    # (TH, W, C)
    top = combine_silu(tops) * (t > 0).astype(cdt)            # zero row at image top
    bot = combine_silu(bots) * (t < nt - 1).astype(cdt)       # zero row at image bottom

    # ---- depthwise 3x3, padding=1 ----
    # H-extended activation: (TH+2, W, C); +-1 H shifts are free leading-dim slices.
    ext = jnp.concatenate([top[None], act, bot[None]], axis=0)

    # +-1 W shifts via a zero column == the conv's zero padding in W (mask-free).
    zcol = jnp.zeros((TH + 2, 1, C), cdt)
    ext_l = jnp.concatenate([zcol, ext[:, :W - 1, :]], axis=1)   # ext_l[., w] = ext[., w-1]
    ext_r = jnp.concatenate([ext[:, 1:, :], zcol], axis=1)       # ext_r[., w] = ext[., w+1]

    dwk = dw_ref[...]                                            # (9, C), index = kh*3 + kw
    dw_out = ext_l[0:TH] * dwk[0]
    dw_out = dw_out + ext[0:TH] * dwk[1]
    dw_out = dw_out + ext_r[0:TH] * dwk[2]
    dw_out = dw_out + ext_l[1:TH + 1] * dwk[3]
    dw_out = dw_out + ext[1:TH + 1] * dwk[4]
    dw_out = dw_out + ext_r[1:TH + 1] * dwk[5]
    dw_out = dw_out + ext_l[2:TH + 2] * dwk[6]
    dw_out = dw_out + ext[2:TH + 2] * dwk[7]
    dw_out = dw_out + ext_r[2:TH + 2] * dwk[8]

    # ---- pointwise 1x1 conv (BN scale pre-folded into pw) on the MXU, f32 acc ----
    pw = jnp.dot(dw_out.reshape(TH * W, C), pw_ref[...],
                 preferred_element_type=jnp.float32)
    y = pw + bias_ref[0, :]                                      # folded BN bias
    o_ref[...] = y.reshape(TH, W, C).astype(o_ref.dtype)


def _largest_divisor_at_most(n, cap):
    for d in range(min(cap, n), 0, -1):
        if n % d == 0:
            return d
    return n


def fnode_forward(xs_nhwc, edge_logits, dw_w, pw_w, bn_gamma, bn_beta,
                  bn_mean, bn_var, eps=1e-3, row_tile=8,
                  compute_dtype=jnp.float32, out_dtype=None):
    """xs_nhwc: list of L arrays [N, H, W, C] (same shape).  Returns [N, H, W, C]."""
    L = len(xs_nhwc)
    N, H, W, C = xs_nhwc[0].shape
    if out_dtype is None:
        out_dtype = xs_nhwc[0].dtype

    TH = _largest_divisor_at_most(H, row_tile)   # rows per grid step
    num_t = H // TH

    # ---- tiny glue (stays in JAX): fusion weights + folded BN ----
    ew = jax.nn.relu(edge_logits.astype(jnp.float32))
    wts = (ew / (jnp.sum(ew) + 1e-4)).astype(jnp.float32)                 # [L]
    scale = bn_gamma.astype(jnp.float32) / jnp.sqrt(bn_var.astype(jnp.float32) + eps)
    bias2d = (bn_beta.astype(jnp.float32)
              - bn_mean.astype(jnp.float32) * scale).reshape(1, C)
    dw9 = dw_w.reshape(9, C).astype(compute_dtype)                        # flat tap table
    pw_scaled = (pw_w.astype(jnp.float32) * scale[None, :]).astype(compute_dtype)

    # ---- BlockSpecs: main row tile + 1-row halos (clamped at image borders) ----
    main_spec = pl.BlockSpec((None, TH, W, C), lambda n, t: (n, t, 0, 0))
    top_spec = pl.BlockSpec((None, None, W, C),
                            lambda n, t: (n, jnp.maximum(t * TH - 1, 0), 0, 0))
    bot_spec = pl.BlockSpec((None, None, W, C),
                            lambda n, t: (n, jnp.minimum(t * TH + TH, H - 1), 0, 0))

    in_specs = [pl.BlockSpec(memory_space=pltpu.SMEM)]                    # fusion weights [L]
    in_specs += [main_spec] * L
    in_specs += [top_spec] * L
    in_specs += [bot_spec] * L
    in_specs += [
        pl.BlockSpec((9, C), lambda n, t: (0, 0)),     # depthwise taps   (grid-invariant)
        pl.BlockSpec((C, C), lambda n, t: (0, 0)),     # pointwise weight (BN scale folded)
        pl.BlockSpec((1, C), lambda n, t: (0, 0)),     # folded BN bias
    ]

    out = pl.pallas_call(
        partial(_fnode_kernel, L),
        out_shape=jax.ShapeDtypeStruct((N, H, W, C), out_dtype),
        grid=(N, num_t),
        in_specs=in_specs,
        out_specs=pl.BlockSpec((None, TH, W, C), lambda n, t: (n, t, 0, 0)),
        compiler_params=pltpu.CompilerParams(
            dimension_semantics=("parallel", "parallel")),
    )(wts, *xs_nhwc, *xs_nhwc, *xs_nhwc, dw9, pw_scaled, bias2d)
    return out


def fnode_reference(xs_nhwc, edge_logits, dw_w, pw_w, bn_gamma, bn_beta,
                    bn_mean, bn_var, eps=1e-3):
    """Pure-JAX reference (lax conv) for correctness checking."""
    L = len(xs_nhwc)
    C = xs_nhwc[0].shape[-1]
    ew = jax.nn.relu(edge_logits)
    w = ew / (jnp.sum(ew) + 1e-4)
    comb = sum(w[i] * xs_nhwc[i] for i in range(L))
    act = comb * jax.nn.sigmoid(comb)
    dw_k = dw_w.reshape(3, 3, 1, C)
    dw_out = jax.lax.conv_general_dilated(
        act, dw_k, window_strides=(1, 1), padding="SAME",
        dimension_numbers=("NHWC", "HWIO", "NHWC"),
        feature_group_count=C, precision=jax.lax.Precision.HIGHEST)
    pw = jnp.einsum("nhwc,cd->nhwd", dw_out, pw_w,
                    precision=jax.lax.Precision.HIGHEST)
    scale = bn_gamma / jnp.sqrt(bn_var + eps)
    bias = bn_beta - bn_mean * scale
    return pw * scale + bias


if __name__ == "__main__":
    key = jax.random.PRNGKey(0)
    N, L, C, H, W = 2, 2, 32, 16, 16
    keys = jax.random.split(key, 8)

    # Activations kept NHWC end-to-end (a PyTorch caller would permute once at
    # the model boundary).
    xs_nhwc = [jax.random.normal(keys[0], (N, H, W, C), jnp.float32),
               jax.random.normal(keys[1], (N, H, W, C), jnp.float32)]

    # Deterministic synthetic parameters (shapes from the module's __init__).
    edge_logits = jax.random.normal(keys[2], (L,), jnp.float32) + 1.0   # fastattn edge weights
    dw_w = jax.random.normal(keys[3], (3, 3, C), jnp.float32) * 0.1     # depthwise 3x3 per-channel
    pw_w = jax.random.normal(keys[4], (C, C), jnp.float32) * 0.1        # pointwise Cin x Cout
    bn_gamma = jnp.ones((C,), jnp.float32)
    bn_beta = jnp.zeros((C,), jnp.float32)
    bn_mean = jax.random.normal(keys[5], (C,), jnp.float32) * 0.05
    bn_var = jax.nn.softplus(jax.random.normal(keys[6], (C,), jnp.float32)) + 0.5

    out = fnode_forward(xs_nhwc, edge_logits, dw_w, pw_w,
                        bn_gamma, bn_beta, bn_mean, bn_var, row_tile=8)
    out = jax.block_until_ready(out)

    ref = fnode_reference(xs_nhwc, edge_logits, dw_w, pw_w,
                          bn_gamma, bn_beta, bn_mean, bn_var)
    assert out.shape == (N, H, W, C)
    err = jnp.max(jnp.abs(out - ref))
    assert jnp.allclose(out, ref, atol=2e-4, rtol=2e-4), f"max err {err}"

    print("KERNEL_OK")
</pallas_src>

<mosaic_0001>
module attributes {stable_mosaic.version = 11 : i64} {
  func.func @_fnode_kernel(%arg0: i32, %arg1: i32, %arg2: memref<2xf32, #tpu.memory_space<smem>>, %arg3: memref<1x8x16x32xf32, #tpu.memory_space<vmem>>, %arg4: memref<1x8x16x32xf32, #tpu.memory_space<vmem>>, %arg5: memref<1x1x16x32xf32, #tpu.memory_space<vmem>>, %arg6: memref<1x1x16x32xf32, #tpu.memory_space<vmem>>, %arg7: memref<1x1x16x32xf32, #tpu.memory_space<vmem>>, %arg8: memref<1x1x16x32xf32, #tpu.memory_space<vmem>>, %arg9: memref<9x32xf32, #tpu.memory_space<vmem>>, %arg10: memref<32x32xf32, #tpu.memory_space<vmem>>, %arg11: memref<1x32xf32, #tpu.memory_space<vmem>>, %arg12: memref<1x8x16x32xf32, #tpu.memory_space<vmem>>) attributes {dimension_semantics = [#tpu.dimension_semantics<parallel>, #tpu.dimension_semantics<parallel>], iteration_bounds = array<i64: 2, 2>, scalar_prefetch = 0 : i64, scratch_operands = 0 : i64, tpu.core_type = #tpu.core_type<tc>, window_params = [{transform_indices = @transform_0, window_bounds = array<i64: 2>}, {transform_indices = @transform_1, window_bounds = array<i64: 1, 8, 16, 32>}, {transform_indices = @transform_2, window_bounds = array<i64: 1, 8, 16, 32>}, {transform_indices = @transform_3, window_bounds = array<i64: 1, 1, 16, 32>}, {transform_indices = @transform_4, window_bounds = array<i64: 1, 1, 16, 32>}, {transform_indices = @transform_5, window_bounds = array<i64: 1, 1, 16, 32>}, {transform_indices = @transform_6, window_bounds = array<i64: 1, 1, 16, 32>}, {pipeline_mode = #tpu.pipeline_mode<synchronous>, transform_indices = @transform_7, window_bounds = array<i64: 9, 32>}, {pipeline_mode = #tpu.pipeline_mode<synchronous>, transform_indices = @transform_8, window_bounds = array<i64: 32, 32>}, {pipeline_mode = #tpu.pipeline_mode<synchronous>, transform_indices = @transform_9, window_bounds = array<i64: 1, 32>}, {transform_indices = @transform_10, window_bounds = array<i64: 1, 8, 16, 32>}]} {
    %c0 = arith.constant 0 : index
    %c0_0 = arith.constant 0 : index
    %c0_1 = arith.constant 0 : index
    %c0_2 = arith.constant 0 : index
    %0 = vector.load %arg3[%c0, %c0_0, %c0_1, %c0_2] : memref<1x8x16x32xf32, #tpu.memory_space<vmem>>, vector<1x8x16x32xf32>
    %1 = vector.shape_cast %0 : vector<1x8x16x32xf32> to vector<8x16x32xf32>
    %c0_3 = arith.constant 0 : index
    %2 = memref.load %arg2[%c0_3] : memref<2xf32, #tpu.memory_space<smem>>
    %3 = vector.broadcast %2 : f32 to vector<8x16x32xf32>
    %4 = arith.mulf %1, %3 : vector<8x16x32xf32>
    %c0_4 = arith.constant 0 : index
    %c0_5 = arith.constant 0 : index
    %c0_6 = arith.constant 0 : index
    %c0_7 = arith.constant 0 : index
    %5 = vector.load %arg4[%c0_4, %c0_5, %c0_6, %c0_7] : memref<1x8x16x32xf32, #tpu.memory_space<vmem>>, vector<1x8x16x32xf32>
    %6 = vector.shape_cast %5 : vector<1x8x16x32xf32> to vector<8x16x32xf32>
    %c1 = arith.constant 1 : index
    %7 = memref.load %arg2[%c1] : memref<2xf32, #tpu.memory_space<smem>>
    %8 = vector.broadcast %7 : f32 to vector<8x16x32xf32>
    %9 = arith.mulf %6, %8 : vector<8x16x32xf32>
    %10 = arith.addf %4, %9 : vector<8x16x32xf32>
    %11 = arith.negf %10 : vector<8x16x32xf32>
    %12 = math.exp %11 : vector<8x16x32xf32>
    %cst = arith.constant 1.000000e+00 : f32
    %13 = vector.broadcast %cst : f32 to vector<8x16x32xf32>
    %14 = arith.addf %13, %12 : vector<8x16x32xf32>
    %15 = arith.divf %13, %14 : vector<8x16x32xf32>
    %16 = arith.mulf %10, %15 : vector<8x16x32xf32>
    %c0_8 = arith.constant 0 : index
    %c0_9 = arith.constant 0 : index
    %c0_10 = arith.constant 0 : index
    %c0_11 = arith.constant 0 : index
    %17 = vector.load %arg5[%c0_8, %c0_9, %c0_10, %c0_11] : memref<1x1x16x32xf32, #tpu.memory_space<vmem>>, vector<1x1x16x32xf32>
    %18 = vector.shape_cast %17 : vector<1x1x16x32xf32> to vector<16x32xf32>
    %c0_12 = arith.constant 0 : index
    %19 = memref.load %arg2[%c0_12] : memref<2xf32, #tpu.memory_space<smem>>
    %20 = vector.broadcast %19 : f32 to vector<16x32xf32>
    %21 = arith.mulf %18, %20 : vector<16x32xf32>
    %c0_13 = arith.constant 0 : index
    %c0_14 = arith.constant 0 : index
    %c0_15 = arith.constant 0 : index
    %c0_16 = arith.constant 0 : index
    %22 = vector.load %arg6[%c0_13, %c0_14, %c0_15, %c0_16] : memref<1x1x16x32xf32, #tpu.memory_space<vmem>>, vector<1x1x16x32xf32>
    %23 = vector.shape_cast %22 : vector<1x1x16x32xf32> to vector<16x32xf32>
    %c1_17 = arith.constant 1 : index
    %24 = memref.load %arg2[%c1_17] : memref<2xf32, #tpu.memory_space<smem>>
    %25 = vector.broadcast %24 : f32 to vector<16x32xf32>
    %26 = arith.mulf %23, %25 : vector<16x32xf32>
    %27 = arith.addf %21, %26 : vector<16x32xf32>
    %28 = arith.negf %27 : vector<16x32xf32>
    %29 = math.exp %28 : vector<16x32xf32>
    %cst_18 = arith.constant 1.000000e+00 : f32
    %30 = vector.broadcast %cst_18 : f32 to vector<16x32xf32>
    %31 = arith.addf %30, %29 : vector<16x32xf32>
    %32 = arith.divf %30, %31 : vector<16x32xf32>
    %33 = arith.mulf %27, %32 : vector<16x32xf32>
    %c0_i32 = arith.constant 0 : i32
    %34 = arith.cmpi sgt, %arg1, %c0_i32 : i32
    %35 = arith.extui %34 : i1 to i32
    %36 = arith.sitofp %35 : i32 to f32
    %37 = vector.broadcast %36 : f32 to vector<16x32xf32>
    %38 = arith.mulf %33, %37 : vector<16x32xf32>
    %c0_19 = arith.constant 0 : index
    %c0_20 = arith.constant 0 : index
    %c0_21 = arith.constant 0 : index
    %c0_22 = arith.constant 0 : index
    %39 = vector.load %arg7[%c0_19, %c0_20, %c0_21, %c0_22] : memref<1x1x16x32xf32, #tpu.memory_space<vmem>>, vector<1x1x16x32xf32>
    %40 = vector.shape_cast %39 : vector<1x1x16x32xf32> to vector<16x32xf32>
    %c0_23 = arith.constant 0 : index
    %41 = memref.load %arg2[%c0_23] : memref<2xf32, #tpu.memory_space<smem>>
    %42 = vector.broadcast %41 : f32 to vector<16x32xf32>
    %43 = arith.mulf %40, %42 : vector<16x32xf32>
    %c0_24 = arith.constant 0 : index
    %c0_25 = arith.constant 0 : index
    %c0_26 = arith.constant 0 : index
    %c0_27 = arith.constant 0 : index
    %44 = vector.load %arg8[%c0_24, %c0_25, %c0_26, %c0_27] : memref<1x1x16x32xf32, #tpu.memory_space<vmem>>, vector<1x1x16x32xf32>
    %45 = vector.shape_cast %44 : vector<1x1x16x32xf32> to vector<16x32xf32>
    %c1_28 = arith.constant 1 : index
    %46 = memref.load %arg2[%c1_28] : memref<2xf32, #tpu.memory_space<smem>>
    %47 = vector.broadcast %46 : f32 to vector<16x32xf32>
    %48 = arith.mulf %45, %47 : vector<16x32xf32>
    %49 = arith.addf %43, %48 : vector<16x32xf32>
    %50 = arith.negf %49 : vector<16x32xf32>
    %51 = math.exp %50 : vector<16x32xf32>
    %cst_29 = arith.constant 1.000000e+00 : f32
    %52 = vector.broadcast %cst_29 : f32 to vector<16x32xf32>
    %53 = arith.addf %52, %51 : vector<16x32xf32>
    %54 = arith.divf %52, %53 : vector<16x32xf32>
    %55 = arith.mulf %49, %54 : vector<16x32xf32>
    %c1_i32 = arith.constant 1 : i32
    %56 = arith.cmpi slt, %arg1, %c1_i32 : i32
    %57 = arith.extui %56 : i1 to i32
    %58 = arith.sitofp %57 : i32 to f32
    %59 = vector.broadcast %58 : f32 to vector<16x32xf32>
    %60 = arith.mulf %55, %59 : vector<16x32xf32>
    %61 = vector.shape_cast %38 : vector<16x32xf32> to vector<1x16x32xf32>
    %62 = vector.shape_cast %60 : vector<16x32xf32> to vector<1x16x32xf32>
    %63 = tpu.concatenate %61, %16, %62 in 0 : vector<1x16x32xf32>, vector<8x16x32xf32>, vector<1x16x32xf32> -> vector<10x16x32xf32>
    %cst_30 = arith.constant 0.000000e+00 : f32
    %64 = vector.broadcast %cst_30 : f32 to vector<10x1x32xf32>
    %65 = vector.extract_strided_slice %63 {offsets = [0, 0, 0], sizes = [10, 15, 32], strides = [1, 1, 1]} : vector<10x16x32xf32> to vector<10x15x32xf32>
    %66 = tpu.concatenate %64, %65 in 1 : vector<10x1x32xf32>, vector<10x15x32xf32> -> vector<10x16x32xf32>
    %67 = vector.extract_strided_slice %63 {offsets = [0, 1, 0], sizes = [10, 15, 32], strides = [1, 1, 1]} : vector<10x16x32xf32> to vector<10x15x32xf32>
    %68 = tpu.concatenate %67, %64 in 1 : vector<10x15x32xf32>, vector<10x1x32xf32> -> vector<10x16x32xf32>
    %c0_31 = arith.constant 0 : index
    %c0_32 = arith.constant 0 : index
    %69 = vector.load %arg9[%c0_31, %c0_32] : memref<9x32xf32, #tpu.memory_space<vmem>>, vector<9x32xf32>
    %70 = vector.extract_strided_slice %66 {offsets = [0, 0, 0], sizes = [8, 16, 32], strides = [1, 1, 1]} : vector<10x16x32xf32> to vector<8x16x32xf32>
    %71 = vector.extract_strided_slice %69 {offsets = [0, 0], sizes = [1, 32], strides = [1, 1]} : vector<9x32xf32> to vector<1x32xf32>
    %72 = vector.shape_cast %71 : vector<1x32xf32> to vector<32xf32>
    %73 = vector.shape_cast %72 : vector<32xf32> to vector<1x1x32xf32>
    %74 = vector.broadcast %73 : vector<1x1x32xf32> to vector<8x16x32xf32>
    %75 = arith.mulf %70, %74 : vector<8x16x32xf32>
    %76 = vector.extract_strided_slice %63 {offsets = [0, 0, 0], sizes = [8, 16, 32], strides = [1, 1, 1]} : vector<10x16x32xf32> to vector<8x16x32xf32>
    %77 = vector.extract_strided_slice %69 {offsets = [1, 0], sizes = [1, 32], strides = [1, 1]} : vector<9x32xf32> to vector<1x32xf32>
    %78 = vector.shape_cast %77 : vector<1x32xf32> to vector<32xf32>
    %79 = vector.shape_cast %78 : vector<32xf32> to vector<1x1x32xf32>
    %80 = vector.broadcast %79 : vector<1x1x32xf32> to vector<8x16x32xf32>
    %81 = arith.mulf %76, %80 : vector<8x16x32xf32>
    %82 = arith.addf %75, %81 : vector<8x16x32xf32>
    %83 = vector.extract_strided_slice %68 {offsets = [0, 0, 0], sizes = [8, 16, 32], strides = [1, 1, 1]} : vector<10x16x32xf32> to vector<8x16x32xf32>
    %84 = vector.extract_strided_slice %69 {offsets = [2, 0], sizes = [1, 32], strides = [1, 1]} : vector<9x32xf32> to vector<1x32xf32>
    %85 = vector.shape_cast %84 : vector<1x32xf32> to vector<32xf32>
    %86 = vector.shape_cast %85 : vector<32xf32> to vector<1x1x32xf32>
    %87 = vector.broadcast %86 : vector<1x1x32xf32> to vector<8x16x32xf32>
    %88 = arith.mulf %83, %87 : vector<8x16x32xf32>
    %89 = arith.addf %82, %88 : vector<8x16x32xf32>
    %90 = vector.extract_strided_slice %66 {offsets = [1, 0, 0], sizes = [8, 16, 32], strides = [1, 1, 1]} : vector<10x16x32xf32> to vector<8x16x32xf32>
    %91 = vector.extract_strided_slice %69 {offsets = [3, 0], sizes = [1, 32], strides = [1, 1]} : vector<9x32xf32> to vector<1x32xf32>
    %92 = vector.shape_cast %91 : vector<1x32xf32> to vector<32xf32>
    %93 = vector.shape_cast %92 : vector<32xf32> to vector<1x1x32xf32>
    %94 = vector.broadcast %93 : vector<1x1x32xf32> to vector<8x16x32xf32>
    %95 = arith.mulf %90, %94 : vector<8x16x32xf32>
    %96 = arith.addf %89, %95 : vector<8x16x32xf32>
    %97 = vector.extract_strided_slice %63 {offsets = [1, 0, 0], sizes = [8, 16, 32], strides = [1, 1, 1]} : vector<10x16x32xf32> to vector<8x16x32xf32>
    %98 = vector.extract_strided_slice %69 {offsets = [4, 0], sizes = [1, 32], strides = [1, 1]} : vector<9x32xf32> to vector<1x32xf32>
    %99 = vector.shape_cast %98 : vector<1x32xf32> to vector<32xf32>
    %100 = vector.shape_cast %99 : vector<32xf32> to vector<1x1x32xf32>
    %101 = vector.broadcast %100 : vector<1x1x32xf32> to vector<8x16x32xf32>
    %102 = arith.mulf %97, %101 : vector<8x16x32xf32>
    %103 = arith.addf %96, %102 : vector<8x16x32xf32>
    %104 = vector.extract_strided_slice %68 {offsets = [1, 0, 0], sizes = [8, 16, 32], strides = [1, 1, 1]} : vector<10x16x32xf32> to vector<8x16x32xf32>
    %105 = vector.extract_strided_slice %69 {offsets = [5, 0], sizes = [1, 32], strides = [1, 1]} : vector<9x32xf32> to vector<1x32xf32>
    %106 = vector.shape_cast %105 : vector<1x32xf32> to vector<32xf32>
    %107 = vector.shape_cast %106 : vector<32xf32> to vector<1x1x32xf32>
    %108 = vector.broadcast %107 : vector<1x1x32xf32> to vector<8x16x32xf32>
    %109 = arith.mulf %104, %108 : vector<8x16x32xf32>
    %110 = arith.addf %103, %109 : vector<8x16x32xf32>
    %111 = vector.extract_strided_slice %66 {offsets = [2, 0, 0], sizes = [8, 16, 32], strides = [1, 1, 1]} : vector<10x16x32xf32> to vector<8x16x32xf32>
    %112 = vector.extract_strided_slice %69 {offsets = [6, 0], sizes = [1, 32], strides = [1, 1]} : vector<9x32xf32> to vector<1x32xf32>
    %113 = vector.shape_cast %112 : vector<1x32xf32> to vector<32xf32>
    %114 = vector.shape_cast %113 : vector<32xf32> to vector<1x1x32xf32>
    %115 = vector.broadcast %114 : vector<1x1x32xf32> to vector<8x16x32xf32>
    %116 = arith.mulf %111, %115 : vector<8x16x32xf32>
    %117 = arith.addf %110, %116 : vector<8x16x32xf32>
    %118 = vector.extract_strided_slice %63 {offsets = [2, 0, 0], sizes = [8, 16, 32], strides = [1, 1, 1]} : vector<10x16x32xf32> to vector<8x16x32xf32>
    %119 = vector.extract_strided_slice %69 {offsets = [7, 0], sizes = [1, 32], strides = [1, 1]} : vector<9x32xf32> to vector<1x32xf32>
    %120 = vector.shape_cast %119 : vector<1x32xf32> to vector<32xf32>
    %121 = vector.shape_cast %120 : vector<32xf32> to vector<1x1x32xf32>
    %122 = vector.broadcast %121 : vector<1x1x32xf32> to vector<8x16x32xf32>
    %123 = arith.mulf %118, %122 : vector<8x16x32xf32>
    %124 = arith.addf %117, %123 : vector<8x16x32xf32>
    %125 = vector.extract_strided_slice %68 {offsets = [2, 0, 0], sizes = [8, 16, 32], strides = [1, 1, 1]} : vector<10x16x32xf32> to vector<8x16x32xf32>
    %126 = vector.extract_strided_slice %69 {offsets = [8, 0], sizes = [1, 32], strides = [1, 1]} : vector<9x32xf32> to vector<1x32xf32>
    %127 = vector.shape_cast %126 : vector<1x32xf32> to vector<32xf32>
    %128 = vector.shape_cast %127 : vector<32xf32> to vector<1x1x32xf32>
    %129 = vector.broadcast %128 : vector<1x1x32xf32> to vector<8x16x32xf32>
    %130 = arith.mulf %125, %129 : vector<8x16x32xf32>
    %131 = arith.addf %124, %130 : vector<8x16x32xf32>
    %132 = vector.shape_cast %131 : vector<8x16x32xf32> to vector<128x32xf32>
    %c0_33 = arith.constant 0 : index
    %c0_34 = arith.constant 0 : index
    %133 = vector.load %arg10[%c0_33, %c0_34] : memref<32x32xf32, #tpu.memory_space<vmem>>, vector<32x32xf32>
    %cst_35 = arith.constant dense<0.000000e+00> : vector<128x32xf32>
    %134 = tpu.matmul %132, %133, %cst_35 {dimension_numbers = #tpu.dot_dimension_numbers<[1], [0], [0], [1], [0, 0, 1, 1], [], []>} : vector<128x32xf32>, vector<32x32xf32>, vector<128x32xf32> -> vector<128x32xf32>
    %c0_36 = arith.constant 0 : index
    %c0_37 = arith.constant 0 : index
    %135 = vector.load %arg11[%c0_36, %c0_37] : memref<1x32xf32, #tpu.memory_space<vmem>>, vector<1x32xf32>
    %136 = vector.shape_cast %135 : vector<1x32xf32> to vector<32xf32>
    %137 = vector.shape_cast %136 : vector<32xf32> to vector<1x32xf32>
    %138 = vector.broadcast %137 : vector<1x32xf32> to vector<128x32xf32>
    %139 = arith.addf %134, %138 : vector<128x32xf32>
    %140 = vector.shape_cast %139 : vector<128x32xf32> to vector<8x16x32xf32>
    %c0_38 = arith.constant 0 : index
    %c0_39 = arith.constant 0 : index
    %c0_40 = arith.constant 0 : index
    %c0_41 = arith.constant 0 : index
    %141 = vector.load %arg12[%c0_38, %c0_39, %c0_40, %c0_41] : memref<1x8x16x32xf32, #tpu.memory_space<vmem>>, vector<1x8x16x32xf32>
    %142 = vector.shape_cast %141 : vector<1x8x16x32xf32> to vector<8x16x32xf32>
    %143 = vector.shape_cast %140 : vector<8x16x32xf32> to vector<1x8x16x32xf32>
    tpu.vector_store %arg12[%c0_38, %c0_39, %c0_40, %c0_41], %143 {strides = array<i32>} : memref<1x8x16x32xf32, #tpu.memory_space<vmem>>, vector<1x8x16x32xf32>,
    return
  }
  func.func @transform_0(%arg0: i32, %arg1: i32) -> i32 {
    %c0_i32 = arith.constant 0 : i32
    %c0_i32_0 = arith.constant 0 : i32
    return %c0_i32 : i32
  }
  func.func @transform_1(%arg0: i32, %arg1: i32) -> (i32, i32, i32, i32) {
    %c0_i32 = arith.constant 0 : i32
    %c0_i32_0 = arith.constant 0 : i32
    %c0_i32_1 = arith.constant 0 : i32
    return %arg0, %arg1, %c0_i32, %c0_i32_0 : i32, i32, i32, i32
  }
  func.func @transform_2(%arg0: i32, %arg1: i32) -> (i32, i32, i32, i32) {
    %c0_i32 = arith.constant 0 : i32
    %c0_i32_0 = arith.constant 0 : i32
    %c0_i32_1 = arith.constant 0 : i32
    return %arg0, %arg1, %c0_i32, %c0_i32_0 : i32, i32, i32, i32
  }
  func.func @transform_3(%arg0: i32, %arg1: i32) -> (i32, i32, i32, i32) {
    %c8_i32 = arith.constant 8 : i32
    %0 = arith.muli %arg1, %c8_i32 : i32
    %c1_i32 = arith.constant 1 : i32
    %1 = arith.subi %0, %c1_i32 : i32
    %c0_i32 = arith.constant 0 : i32
    %2 = arith.maxsi %1, %c0_i32 : i32
    %c0_i32_0 = arith.constant 0 : i32
    %c0_i32_1 = arith.constant 0 : i32
    %c0_i32_2 = arith.constant 0 : i32
    return %arg0, %2, %c0_i32_0, %c0_i32_1 : i32, i32, i32, i32
  }
  func.func @transform_4(%arg0: i32, %arg1: i32) -> (i32, i32, i32, i32) {
    %c8_i32 = arith.constant 8 : i32
    %0 = arith.muli %arg1, %c8_i32 : i32
    %c1_i32 = arith.constant 1 : i32
    %1 = arith.subi %0, %c1_i32 : i32
    %c0_i32 = arith.constant 0 : i32
    %2 = arith.maxsi %1, %c0_i32 : i32
    %c0_i32_0 = arith.constant 0 : i32
    %c0_i32_1 = arith.constant 0 : i32
    %c0_i32_2 = arith.constant 0 : i32
    return %arg0, %2, %c0_i32_0, %c0_i32_1 : i32, i32, i32, i32
  }
  func.func @transform_5(%arg0: i32, %arg1: i32) -> (i32, i32, i32, i32) {
    %c8_i32 = arith.constant 8 : i32
    %0 = arith.muli %arg1, %c8_i32 : i32
    %c8_i32_0 = arith.constant 8 : i32
    %1 = arith.addi %0, %c8_i32_0 : i32
    %c15_i32 = arith.constant 15 : i32
    %2 = arith.minsi %1, %c15_i32 : i32
    %c0_i32 = arith.constant 0 : i32
    %c0_i32_1 = arith.constant 0 : i32
    %c0_i32_2 = arith.constant 0 : i32
    return %arg0, %2, %c0_i32, %c0_i32_1 : i32, i32, i32, i32
  }
  func.func @transform_6(%arg0: i32, %arg1: i32) -> (i32, i32, i32, i32) {
    %c8_i32 = arith.constant 8 : i32
    %0 = arith.muli %arg1, %c8_i32 : i32
    %c8_i32_0 = arith.constant 8 : i32
    %1 = arith.addi %0, %c8_i32_0 : i32
    %c15_i32 = arith.constant 15 : i32
    %2 = arith.minsi %1, %c15_i32 : i32
    %c0_i32 = arith.constant 0 : i32
    %c0_i32_1 = arith.constant 0 : i32
    %c0_i32_2 = arith.constant 0 : i32
    return %arg0, %2, %c0_i32, %c0_i32_1 : i32, i32, i32, i32
  }
  func.func @transform_7(%arg0: i32, %arg1: i32) -> (i32, i32) {
    %c0_i32 = arith.constant 0 : i32
    %c0_i32_0 = arith.constant 0 : i32
    %c0_i32_1 = arith.constant 0 : i32
    return %c0_i32, %c0_i32_0 : i32, i32
  }
  func.func @transform_8(%arg0: i32, %arg1: i32) -> (i32, i32) {
    %c0_i32 = arith.constant 0 : i32
    %c0_i32_0 = arith.constant 0 : i32
    %c0_i32_1 = arith.constant 0 : i32
    return %c0_i32, %c0_i32_0 : i32, i32
  }
  func.func @transform_9(%arg0: i32, %arg1: i32) -> (i32, i32) {
    %c0_i32 = arith.constant 0 : i32
    %c0_i32_0 = arith.constant 0 : i32
    %c0_i32_1 = arith.constant 0 : i32
    return %c0_i32, %c0_i32_0 : i32, i32
  }
  func.func @transform_10(%arg0: i32, %arg1: i32) -> (i32, i32, i32, i32) {
    %c0_i32 = arith.constant 0 : i32
    %c0_i32_0 = arith.constant 0 : i32
    %c0_i32_1 = arith.constant 0 : i32
    return %arg0, %arg1, %c0_i32, %c0_i32_0 : i32, i32, i32, i32
  }
}

</mosaic_0001>

<llo_original>
// kernel: tpu_custom_call.1
$region0: #{tpu_custom_call.1}
  #allocation0 [shape = 'u32[]', space=smem, size = 0x4, offset = 0x4, fixed_abs, tag = 'smem constant byte address 0x4 - core index']
  #allocation1 [shape = 'u32[144,128]{1,0:T(1,128)}', space=vmem, size = 0x12000, scoped, tag = 'internal scratch']
  %s0 = inlined_call_operand.hbm [shape: f32[2], index: 0, kind: input, shape index: {}]
  %s1 = inlined_call_operand.hbm [shape: f32[2,16,16,32], index: 1, kind: input, shape index: {}]
  %s2 = inlined_call_operand.hbm [shape: f32[2,16,16,32], index: 2, kind: input, shape index: {}]
  %s3 = inlined_call_operand.hbm [shape: f32[2,16,16,32], index: 3, kind: input, shape index: {}]
  %s4 = inlined_call_operand.hbm [shape: f32[2,16,16,32], index: 4, kind: input, shape index: {}]
  %s5 = inlined_call_operand.hbm [shape: f32[2,16,16,32], index: 5, kind: input, shape index: {}]
  %s6 = inlined_call_operand.hbm [shape: f32[2,16,16,32], index: 6, kind: input, shape index: {}]
  %s7 = inlined_call_operand.vmem [shape: f32[9,32], index: 7, kind: input, shape index: {}]
  %s8 = inlined_call_operand.hbm [shape: f32[32,32], index: 8, kind: input, shape index: {}]
  %s9 = inlined_call_operand.vmem [shape: f32[1,32], index: 9, kind: input, shape index: {}]
  %s10 = inlined_call_operand.hbm [shape: f32[2,16,16,32], index: 10, kind: output, shape index: {}]
  %s11 = sld [smem:[#allocation0]]
  $region105: #{tpu_custom_call.1} parent=0
    _
  %s13 = ssub.s32 1, %s11
  %s14 = scalar_select 0, %s13, %s11
  $region1: #{tpu_custom_call.1} parent=0
    #allocation2 [shape = 'u8[512]{0}', space=smem, size = 0x200, scoped, tag = 'input window, operand 0, single buffered']
    #allocation3 [shape = 's32[2]{0}', space=sflag, size = 0x8, scoped, tag = 'scoped memory for tpu_custom_call.1']
    #allocation4 [shape = 's32[2]{0}', space=sflag, size = 0x8, scoped, tag = 'scoped memory for tpu_custom_call.1']
    #allocation5 [shape = 's32[2]{0}', space=sflag, size = 0x8, scoped, tag = 'scoped memory for tpu_custom_call.1']
    #allocation6 [shape = 'u8[131072]{0}', space=vmem, size = 0x20000, scoped, tag = 'input window, operand 1']
    #allocation7 [shape = 'u8[131072]{0}', space=vmem, size = 0x20000, scoped, tag = 'input window, operand 2']
    #allocation8 [shape = 's32[2]{0}', space=sflag, size = 0x8, scoped, tag = 'scoped memory for tpu_custom_call.1']
    #allocation9 [shape = 'u8[16384]{0}', space=vmem, size = 0x4000, scoped, tag = 'input window, operand 3']
    #allocation10 [shape = 'u8[16384]{0}', space=vmem, size = 0x4000, scoped, tag = 'input window, operand 4']
    #allocation11 [shape = 's32[2]{0}', space=sflag, size = 0x8, scoped, tag = 'scoped memory for tpu_custom_call.1']
    #allocation12 [shape = 'u8[16384]{0}', space=vmem, size = 0x4000, scoped, tag = 'input window, operand 5']
    #allocation13 [shape = 'u8[16384]{0}', space=vmem, size = 0x4000, scoped, tag = 'input window, operand 6']
    #allocation14 [shape = 's32[2]{0}', space=sflag, size = 0x8, scoped, tag = 'scoped memory for tpu_custom_call.1']
    #allocation15 [shape = 'u8[16384]{0}', space=vmem, size = 0x4000, scoped, tag = 'input window, operand 8, single buffered']
    #allocation16 [shape = 'u8[131072]{0}', space=vmem, size = 0x20000, scoped, tag = 'output window, operand 0']
    %15 = vsyncpa [#allocation5], 0
    %16 = vsyncpa [#allocation3], 0
    %s17 = scalar_lea.sflag [#allocation3], 1
    %18 = vsyncpa %s17, 0
    %19 = vsyncpa [#allocation8], 0
    %s20 = scalar_lea.sflag [#allocation8], 1
    %21 = vsyncpa %s20, 0
    %22 = vsyncpa [#allocation11], 0
    %s23 = scalar_lea.sflag [#allocation11], 1
    %24 = vsyncpa %s23, 0
    %25 = vsyncpa [#allocation14], 0
    %s26 = scalar_lea.sflag [#allocation14], 1
    %27 = vsyncpa %s26, 0
    %28 = vsyncpa [#allocation4], 0
    %s29 = scalar_lea.sflag [#allocation4], 1
    %30 = vsyncpa %s29, 0
    loop: start=0, step=1, limit=6
    $region2: #{tpu_custom_call.1} parent=1 // loop_pre_header
      _
    $region3: #{tpu_custom_call.1} parent=1 // loop_header
      %s32 = sphi 0, %s36
      %p33 = scmp.ge.s32.totalorder %s32, 6
      %s39 = sphi 0, %s51
      %s40 = sphi 0, %s47
      %s41 = sphi 0, %s39
      %s42 = sphi 0, %s40
      %s43 = sphi 0, %s41
      %s44 = sphi 0, %s42
      %s52 = sphi 0, %s52
      %s54 = sphi 0, %s52
      %s55 = sphi 0, %s54
      %s69 = sphi 0, %s55
      %s77 = sphi 0, %s79
      %s80 = sphi 0, %s77
      %s81 = sphi 0, %s80
      %s97 = sphi 0, %s81
      %s105 = sphi 0, %s107
      %s108 = sphi 0, %s105
      %s109 = sphi 0, %s108
      %s125 = sphi 0, %s109
      %s141 = sphi 0, %s143
      %s144 = sphi 0, %s141
      %s145 = sphi 0, %s144
      %s161 = sphi 0, %s145
      %s177 = sphi 0, %s179
      %s180 = sphi 0, %s177
      %s181 = sphi 0, %s180
      %s197 = sphi 0, %s181
      %s213 = sphi 0, %s215
      %s216 = sphi 0, %s213
      %s217 = sphi 0, %s216
      %s233 = sphi 0, %s217
      %s249 = sphi 0, %s251
      %s252 = sphi 0, %s249
      %s253 = sphi 0, %s252
      %s269 = sphi 0, %s253
      %s273 = sphi 0, %s273
      %s275 = sphi 0, %s273
      %s276 = sphi 0, %s275
      %s290 = sphi 0, %s276
      %s294 = sphi 0, %s294
      %s296 = sphi 0, %s294
      %s297 = sphi 0, %s296
      %s311 = sphi 0, %s297
      %s315 = sphi 0, %s315
      %s317 = sphi 0, %s315
      %s318 = sphi 0, %s317
      %s332 = sphi 0, %s318
      %s340 = sphi 0, %s342
      %s343 = sphi 0, %s340
      %s344 = sphi 0, %s343
      %s360 = sphi 0, %s344
    $region4: #{tpu_custom_call.1} parent=1 // loop_header_branch
      %35 = sbr.rel (%p33) target = $region8
    $region5: #{tpu_custom_call.1} parent=1 // loop_body
      %s37 = ssub.s32 %s32, 1
      %s38 = ssub.s32 %s32, 2
      %s45 = sadd.s32 1, %s40
      %p46 = scmp.ge.s32.totalorder %s45, 2
      %s47 = scalar_select %p46, 0, %s45
      %s48 = sadd.s32 1, %s39
      %s49 = scalar_select %p46, %s48, %s39
      %p50 = scmp.ge.s32.totalorder %s49, 2
      %s51 = scalar_select %p50, 0, %s49
      %s53 = sadd.s32 %s52, 1
      %p56 = scmp.eq.s32.totalorder %s32, 3
      %p57 = scmp.ne.s32.totalorder %s52, %s54
      %p58 = scmp.eq.s32.totalorder %s32, 0
      %p59 = por %p57, %p58
      %p60 = scmp.ne.s32.totalorder %s52, %s54
      %p61 = scmp.eq.s32.totalorder %s37, 3
      %p62 = por %p60, %p61
      %p63 = scmp.ne.s32.totalorder %s54, %s55
      %p64 = scmp.eq.s32.totalorder %s37, 0
      %p65 = por %p63, %p64
      %p66 = scmp.ne.s32.totalorder %s54, %s55
      %p67 = scmp.eq.s32.totalorder %s38, 3
      %p68 = por %p66, %p67
      %p70 = scmp.ne.s32.totalorder %s55, %s69
      %p71 = scmp.eq.s32.totalorder %s38, 0
      %p72 = por %p70, %p71
      %s73 = ssub.s32 %s39, %s51
      %s74 = ssub.s32 %s40, %s47
      %s75 = sor.u32 %s73, %s74
      %p76 = scmp.eq.s32.totalorder %s75, 0
      %s78 = sadd.s32 %s77, 1
      %s79 = scalar_select %p76, %s77, %s78
      %p82 = pneg %p76
      %p83 = scmp.eq.s32.totalorder %s32, 3
      %p84 = por %p82, %p83
      %p85 = scmp.ne.s32.totalorder %s77, %s80
      %p86 = scmp.eq.s32.totalorder %s32, 0
      %p87 = por %p85, %p86
      %p88 = scmp.ne.s32.totalorder %s77, %s80
      %p89 = scmp.eq.s32.totalorder %s37, 3
      %p90 = por %p88, %p89
      %p91 = scmp.ne.s32.totalorder %s80, %s81
      %p92 = scmp.eq.s32.totalorder %s37, 0
      %p93 = por %p91, %p92
      %p94 = scmp.ne.s32.totalorder %s80, %s81
      %p95 = scmp.eq.s32.totalorder %s38, 3
      %p96 = por %p94, %p95
      %p98 = scmp.ne.s32.totalorder %s81, %s97
      %p99 = scmp.eq.s32.totalorder %s38, 0
      %p100 = por %p98, %p99
      %s101 = ssub.s32 %s39, %s51
      %s102 = ssub.s32 %s40, %s47
      %s103 = sor.u32 %s101, %s102
      %p104 = scmp.eq.s32.totalorder %s103, 0
      %s106 = sadd.s32 %s105, 1
      %s107 = scalar_select %p104, %s105, %s106
      %p110 = pneg %p104
      %p111 = scmp.eq.s32.totalorder %s32, 3
      %p112 = por %p110, %p111
      %p113 = scmp.ne.s32.totalorder %s105, %s108
      %p114 = scmp.eq.s32.totalorder %s32, 0
      %p115 = por %p113, %p114
      %p116 = scmp.ne.s32.totalorder %s105, %s108
      %p117 = scmp.eq.s32.totalorder %s37, 3
      %p118 = por %p116, %p117
      %p119 = scmp.ne.s32.totalorder %s108, %s109
      %p120 = scmp.eq.s32.totalorder %s37, 0
      %p121 = por %p119, %p120
      %p122 = scmp.ne.s32.totalorder %s108, %s109
      %p123 = scmp.eq.s32.totalorder %s38, 3
      %p124 = por %p122, %p123
      %p126 = scmp.ne.s32.totalorder %s109, %s125
      %p127 = scmp.eq.s32.totalorder %s38, 0
      %p128 = por %p126, %p127
      %s129 = smul.u32 %s40, 8
      %s130 = ssub.s32 %s129, 1
      %p131 = scmp.gt.s32.totalorder %s130, 0
      %s132 = scalar_select %p131, %s130, 0
      %s133 = smul.u32 %s47, 8
      %s134 = ssub.s32 %s133, 1
      %p135 = scmp.gt.s32.totalorder %s134, 0
      %s136 = scalar_select %p135, %s134, 0
      %s137 = ssub.s32 %s39, %s51
      %s138 = ssub.s32 %s132, %s136
      %s139 = sor.u32 %s137, %s138
      %p140 = scmp.eq.s32.totalorder %s139, 0
      %s142 = sadd.s32 %s141, 1
      %s143 = scalar_select %p140, %s141, %s142
      %p146 = pneg %p140
      %p147 = scmp.eq.s32.totalorder %s32, 3
      %p148 = por %p146, %p147
      %p149 = scmp.ne.s32.totalorder %s141, %s144
      %p150 = scmp.eq.s32.totalorder %s32, 0
      %p151 = por %p149, %p150
      %p152 = scmp.ne.s32.totalorder %s141, %s144
      %p153 = scmp.eq.s32.totalorder %s37, 3
      %p154 = por %p152, %p153
      %p155 = scmp.ne.s32.totalorder %s144, %s145
      %p156 = scmp.eq.s32.totalorder %s37, 0
      %p157 = por %p155, %p156
      %p158 = scmp.ne.s32.totalorder %s144, %s145
      %p159 = scmp.eq.s32.totalorder %s38, 3
      %p160 = por %p158, %p159
      %p162 = scmp.ne.s32.totalorder %s145, %s161
      %p163 = scmp.eq.s32.totalorder %s38, 0
      %p164 = por %p162, %p163
      %s165 = smul.u32 %s40, 8
      %s166 = ssub.s32 %s165, 1
      %p167 = scmp.gt.s32.totalorder %s166, 0
      %s168 = scalar_select %p167, %s166, 0
      %s169 = smul.u32 %s47, 8
      %s170 = ssub.s32 %s169, 1
      %p171 = scmp.gt.s32.totalorder %s170, 0
      %s172 = scalar_select %p171, %s170, 0
      %s173 = ssub.s32 %s39, %s51
      %s174 = ssub.s32 %s168, %s172
      %s175 = sor.u32 %s173, %s174
      %p176 = scmp.eq.s32.totalorder %s175, 0
      %s178 = sadd.s32 %s177, 1
      %s179 = scalar_select %p176, %s177, %s178
      %p182 = pneg %p176
      %p183 = scmp.eq.s32.totalorder %s32, 3
      %p184 = por %p182, %p183
      %p185 = scmp.ne.s32.totalorder %s177, %s180
      %p186 = scmp.eq.s32.totalorder %s32, 0
      %p187 = por %p185, %p186
      %p188 = scmp.ne.s32.totalorder %s177, %s180
      %p189 = scmp.eq.s32.totalorder %s37, 3
      %p190 = por %p188, %p189
      %p191 = scmp.ne.s32.totalorder %s180, %s181
      %p192 = scmp.eq.s32.totalorder %s37, 0
      %p193 = por %p191, %p192
      %p194 = scmp.ne.s32.totalorder %s180, %s181
      %p195 = scmp.eq.s32.totalorder %s38, 3
      %p196 = por %p194, %p195
      %p198 = scmp.ne.s32.totalorder %s181, %s197
      %p199 = scmp.eq.s32.totalorder %s38, 0
      %p200 = por %p198, %p199
      %s201 = smul.u32 %s40, 8
      %s202 = sadd.s32 %s201, 8
      %p203 = scmp.lt.s32.totalorder %s202, 15
      %s204 = scalar_select %p203, %s202, 15
      %s205 = smul.u32 %s47, 8
      %s206 = sadd.s32 %s205, 8
      %p207 = scmp.lt.s32.totalorder %s206, 15
      %s208 = scalar_select %p207, %s206, 15
      %s209 = ssub.s32 %s39, %s51
      %s210 = ssub.s32 %s204, %s208
      %s211 = sor.u32 %s209, %s210
      %p212 = scmp.eq.s32.totalorder %s211, 0
      %s214 = sadd.s32 %s213, 1
      %s215 = scalar_select %p212, %s213, %s214
      %p218 = pneg %p212
      %p219 = scmp.eq.s32.totalorder %s32, 3
      %p220 = por %p218, %p219
      %p221 = scmp.ne.s32.totalorder %s213, %s216
      %p222 = scmp.eq.s32.totalorder %s32, 0
      %p223 = por %p221, %p222
      %p224 = scmp.ne.s32.totalorder %s213, %s216
      %p225 = scmp.eq.s32.totalorder %s37, 3
      %p226 = por %p224, %p225
      %p227 = scmp.ne.s32.totalorder %s216, %s217
      %p228 = scmp.eq.s32.totalorder %s37, 0
      %p229 = por %p227, %p228
      %p230 = scmp.ne.s32.totalorder %s216, %s217
      %p231 = scmp.eq.s32.totalorder %s38, 3
      %p232 = por %p230, %p231
      %p234 = scmp.ne.s32.totalorder %s217, %s233
      %p235 = scmp.eq.s32.totalorder %s38, 0
      %p236 = por %p234, %p235
      %s237 = smul.u32 %s40, 8
      %s238 = sadd.s32 %s237, 8
      %p239 = scmp.lt.s32.totalorder %s238, 15
      %s240 = scalar_select %p239, %s238, 15
      %s241 = smul.u32 %s47, 8
      %s242 = sadd.s32 %s241, 8
      %p243 = scmp.lt.s32.totalorder %s242, 15
      %s244 = scalar_select %p243, %s242, 15
      %s245 = ssub.s32 %s39, %s51
      %s246 = ssub.s32 %s240, %s244
      %s247 = sor.u32 %s245, %s246
      %p248 = scmp.eq.s32.totalorder %s247, 0
      %s250 = sadd.s32 %s249, 1
      %s251 = scalar_select %p248, %s249, %s250
      %p254 = pneg %p248
      %p255 = scmp.eq.s32.totalorder %s32, 3
      %p256 = por %p254, %p255
      %p257 = scmp.ne.s32.totalorder %s249, %s252
      %p258 = scmp.eq.s32.totalorder %s32, 0
      %p259 = por %p257, %p258
      %p260 = scmp.ne.s32.totalorder %s249, %s252
      %p261 = scmp.eq.s32.totalorder %s37, 3
      %p262 = por %p260, %p261
      %p263 = scmp.ne.s32.totalorder %s252, %s253
      %p264 = scmp.eq.s32.totalorder %s37, 0
      %p265 = por %p263, %p264
      %p266 = scmp.ne.s32.totalorder %s252, %s253
      %p267 = scmp.eq.s32.totalorder %s38, 3
      %p268 = por %p266, %p267
      %p270 = scmp.ne.s32.totalorder %s253, %s269
      %p271 = scmp.eq.s32.totalorder %s38, 0
      %p272 = por %p270, %p271
      %s274 = sadd.s32 %s273, 1
      %p277 = scmp.eq.s32.totalorder %s32, 3
      %p278 = scmp.ne.s32.totalorder %s273, %s275
      %p279 = scmp.eq.s32.totalorder %s32, 0
      %p280 = por %p278, %p279
      %p281 = scmp.ne.s32.totalorder %s273, %s275
      %p282 = scmp.eq.s32.totalorder %s37, 3
      %p283 = por %p281, %p282
      %p284 = scmp.ne.s32.totalorder %s275, %s276
      %p285 = scmp.eq.s32.totalorder %s37, 0
      %p286 = por %p284, %p285
      %p287 = scmp.ne.s32.totalorder %s275, %s276
      %p288 = scmp.eq.s32.totalorder %s38, 3
      %p289 = por %p287, %p288
      %p291 = scmp.ne.s32.totalorder %s276, %s290
      %p292 = scmp.eq.s32.totalorder %s38, 0
      %p293 = por %p291, %p292
      %s295 = sadd.s32 %s294, 1
      %p298 = scmp.eq.s32.totalorder %s32, 3
      %p299 = scmp.ne.s32.totalorder %s294, %s296
      %p300 = scmp.eq.s32.totalorder %s32, 0
      %p301 = por %p299, %p300
      %p302 = scmp.ne.s32.totalorder %s294, %s296
      %p303 = scmp.eq.s32.totalorder %s37, 3
      %p304 = por %p302, %p303
      %p305 = scmp.ne.s32.totalorder %s296, %s297
      %p306 = scmp.eq.s32.totalorder %s37, 0
      %p307 = por %p305, %p306
      %p308 = scmp.ne.s32.totalorder %s296, %s297
      %p309 = scmp.eq.s32.totalorder %s38, 3
      %p310 = por %p308, %p309
      %p312 = scmp.ne.s32.totalorder %s297, %s311
      %p313 = scmp.eq.s32.totalorder %s38, 0
      %p314 = por %p312, %p313
      %s316 = sadd.s32 %s315, 1
      %p319 = scmp.eq.s32.totalorder %s32, 3
      %p320 = scmp.ne.s32.totalorder %s315, %s317
      %p321 = scmp.eq.s32.totalorder %s32, 0
      %p322 = por %p320, %p321
      %p323 = scmp.ne.s32.totalorder %s315, %s317
      %p324 = scmp.eq.s32.totalorder %s37, 3
      %p325 = por %p323, %p324
      %p326 = scmp.ne.s32.totalorder %s317, %s318
      %p327 = scmp.eq.s32.totalorder %s37, 0
      %p328 = por %p326, %p327
      %p329 = scmp.ne.s32.totalorder %s317, %s318
      %p330 = scmp.eq.s32.totalorder %s38, 3
      %p331 = por %p329, %p330
      %p333 = scmp.ne.s32.totalorder %s318, %s332
      %p334 = scmp.eq.s32.totalorder %s38, 0
      %p335 = por %p333, %p334
      %s336 = ssub.s32 %s39, %s51
      %s337 = ssub.s32 %s40, %s47
      %s338 = sor.u32 %s336, %s337
      %p339 = scmp.eq.s32.totalorder %s338, 0
      %s341 = sadd.s32 %s340, 1
      %s342 = scalar_select %p339, %s340, %s341
      %p345 = pneg %p339
      %p346 = scmp.eq.s32.totalorder %s32, 3
      %p347 = por %p345, %p346
      %p348 = scmp.ne.s32.totalorder %s340, %s343
      %p349 = scmp.eq.s32.totalorder %s32, 0
      %p350 = por %p348, %p349
      %p351 = scmp.ne.s32.totalorder %s340, %s343
      %p352 = scmp.eq.s32.totalorder %s37, 3
      %p353 = por %p351, %p352
      %p354 = scmp.ne.s32.totalorder %s343, %s344
      %p355 = scmp.eq.s32.totalorder %s37, 0
      %p356 = por %p354, %p355
      %p357 = scmp.ne.s32.totalorder %s343, %s344
      %p358 = scmp.eq.s32.totalorder %s38, 3
      %p359 = por %p357, %p358
      %p361 = scmp.ne.s32.totalorder %s344, %s360
      %p362 = scmp.eq.s32.totalorder %s38, 0
      %p363 = por %p361, %p362
      %p364 = scmp.le.s32.totalorder 1, %s32
      %p365 = scmp.lt.s32.totalorder %s32, 5
      %p366 = pnand %p364, %p365
      %p367 = pneg %p366
      // Predicated region
      $region9: #{tpu_custom_call.1} parent=5 // pred_check
        _
      $region10: #{tpu_custom_call.1} parent=5 // pred_check_branch
        %369 = sbr.rel (%p366) target = $region12
      $region11: #{tpu_custom_call.1} parent=5 // pred_region
        %s370 = ssub.s32 %s32, 1
        // Predicated region
        $region13: #{tpu_custom_call.1} parent=11 // pred_check
          %p371 = pneg %p65
        $region14: #{tpu_custom_call.1} parent=11 // pred_check_branch
          %373 = sbr.rel (%p371) target = $region16
        $region15: #{tpu_custom_call.1} parent=11 // pred_region
          %s375 = ssub.s32 16, 16
          %376 = vsyncadd [#allocation5], %s375
          %379 = dma.hbm_to_smem %s0, 16, [#allocation2], [#allocation5]
        $region16: #{tpu_custom_call.1} parent=11 // pred_fallthru
          _
        // Predicated region
        $region17: #{tpu_custom_call.1} parent=11 // pred_check
          %p380 = pneg %p286
        $region18: #{tpu_custom_call.1} parent=11 // pred_check_branch
          %382 = sbr.rel (%p380) target = $region20
        $region19: #{tpu_custom_call.1} parent=11 // pred_region
          _
        $region20: #{tpu_custom_call.1} parent=11 // pred_fallthru
          _
        // Predicated region
        $region21: #{tpu_custom_call.1} parent=11 // pred_check
          %p383 = pneg %p307
        $region22: #{tpu_custom_call.1} parent=11 // pred_check_branch
          %385 = sbr.rel (%p383) target = $region24
        $region23: #{tpu_custom_call.1} parent=11 // pred_region
          %s387 = ssub.s32 512, 512
          %388 = vsyncadd [#allocation14], %s387
          %s389 = sshll.u32 [#allocation15], 4
          %s390 = int_to_ptr.vmem [resolvable:$true] %s389
          %395 = dma.hbm_to_vmem [thread:$0]  %s8, 512, %s390, [#allocation14], 128, 128, 8
        $region24: #{tpu_custom_call.1} parent=11 // pred_fallthru
          _
        // Predicated region
        $region25: #{tpu_custom_call.1} parent=11 // pred_check
          %p396 = pneg %p328
        $region26: #{tpu_custom_call.1} parent=11 // pred_check_branch
          %398 = sbr.rel (%p396) target = $region28
        $region27: #{tpu_custom_call.1} parent=11 // pred_region
          _
        $region28: #{tpu_custom_call.1} parent=11 // pred_fallthru
          _
      $region12: #{tpu_custom_call.1} parent=5 // pred_fallthru
        _
      %p399 = scmp.lt.s32.totalorder %s32, 4
      // Predicated region
      $region29: #{tpu_custom_call.1} parent=5 // pred_check
        %p400 = pneg %p399
      $region30: #{tpu_custom_call.1} parent=5 // pred_check_branch
        %402 = sbr.rel (%p400) target = $region32
      $region31: #{tpu_custom_call.1} parent=5 // pred_region
        // Predicated region
        $region33: #{tpu_custom_call.1} parent=31 // pred_check
          %p403 = pneg %p87
        $region34: #{tpu_custom_call.1} parent=31 // pred_check_branch
          %405 = sbr.rel (%p403) target = $region36
        $region35: #{tpu_custom_call.1} parent=31 // pred_region
          %s406 = sand.u32 %s77, 1
          %s407 = scalar_lea.sflag [#allocation3], %s406
          %s408 = sand.u32 %s77, 1
          %s409 = smul.addr %s408, 128
          %s410 = scalar_lea.vmem [#allocation6], %s409
          %s411 = smul.u32 8, %s40
          %s413 = ssub.s32 2048, 2048
          %414 = vsyncadd %s407, %s413
          %s415 = smul.addr %s411, 2
          %s416 = smul.addr %s39, 32
          %s417 = sadd.s32 %s415, %s416
          %s418 = smul.addr %s417, 128
          %s419 = scalar_lea.hbm %s1, %s418
          %s420 = sshll.u32 %s410, 4
          %s421 = int_to_ptr.vmem [resolvable:$true] %s420
          %426 = dma.hbm_to_vmem [thread:$0]  %s419, 2048, %s421, %s407, 128, 128, 8
        $region36: #{tpu_custom_call.1} parent=31 // pred_fallthru
          _
        // Predicated region
        $region37: #{tpu_custom_call.1} parent=31 // pred_check
          %p427 = pneg %p115
        $region38: #{tpu_custom_call.1} parent=31 // pred_check_branch
          %429 = sbr.rel (%p427) target = $region40
        $region39: #{tpu_custom_call.1} parent=31 // pred_region
          %s430 = sand.u32 %s32, 1
          %s431 = scalar_lea.sflag [#allocation8], %s430
          %s432 = sand.u32 %s105, 1
          %s433 = smul.addr %s432, 128
          %s434 = scalar_lea.vmem [#allocation7], %s433
          %s435 = smul.u32 8, %s40
          %s437 = ssub.s32 2048, 2048
          %438 = vsyncadd %s431, %s437
          %s439 = smul.addr %s435, 2
          %s440 = smul.addr %s39, 32
          %s441 = sadd.s32 %s439, %s440
          %s442 = smul.addr %s441, 128
          %s443 = scalar_lea.hbm %s2, %s442
          %s444 = sshll.u32 %s434, 4
          %s445 = int_to_ptr.vmem [resolvable:$true] %s444
          %450 = dma.hbm_to_vmem [thread:$0]  %s443, 2048, %s445, %s431, 128, 128, 8
        $region40: #{tpu_custom_call.1} parent=31 // pred_fallthru
          _
        // Predicated region
        $region41: #{tpu_custom_call.1} parent=31 // pred_check
          %p451 = pneg %p151
        $region42: #{tpu_custom_call.1} parent=31 // pred_check_branch
          %453 = sbr.rel (%p451) target = $region44
        $region43: #{tpu_custom_call.1} parent=31 // pred_region
          %s454 = sand.u32 %s32, 1
          %s455 = scalar_lea.sflag [#allocation8], %s454
          %s456 = sand.u32 %s141, 1
          %s457 = smul.addr %s456, 16
          %s458 = scalar_lea.vmem [#allocation9], %s457
          %s459 = smul.u32 %s40, 8
          %s460 = ssub.s32 %s459, 1
          %p461 = scmp.gt.s32.totalorder %s460, 0
          %s462 = scalar_select %p461, %s460, 0
          %s464 = ssub.s32 256, 256
          %465 = vsyncadd %s455, %s464
          %s466 = smul.addr %s462, 2
          %s467 = smul.addr %s39, 32
          %s468 = sadd.s32 %s466, %s467
          %s469 = smul.addr %s468, 128
          %s470 = scalar_lea.hbm %s3, %s469
          %s471 = sshll.u32 %s458, 4
          %s472 = int_to_ptr.vmem [resolvable:$true] %s471
          %477 = dma.hbm_to_vmem [thread:$0]  %s470, 256, %s472, %s455, 128, 128, 8
        $region44: #{tpu_custom_call.1} parent=31 // pred_fallthru
          _
        // Predicated region
        $region45: #{tpu_custom_call.1} parent=31 // pred_check
          %p478 = pneg %p187
        $region46: #{tpu_custom_call.1} parent=31 // pred_check_branch
          %480 = sbr.rel (%p478) target = $region48
        $region47: #{tpu_custom_call.1} parent=31 // pred_region
          %s481 = sand.u32 %s32, 1
          %s482 = scalar_lea.sflag [#allocation11], %s481
          %s483 = sand.u32 %s177, 1
          %s484 = smul.addr %s483, 16
          %s485 = scalar_lea.vmem [#allocation10], %s484
          %s486 = smul.u32 %s40, 8
          %s487 = ssub.s32 %s486, 1
          %p488 = scmp.gt.s32.totalorder %s487, 0
          %s489 = scalar_select %p488, %s487, 0
          %s491 = ssub.s32 256, 256
          %492 = vsyncadd %s482, %s491
          %s493 = smul.addr %s489, 2
          %s494 = smul.addr %s39, 32
          %s495 = sadd.s32 %s493, %s494
          %s496 = smul.addr %s495, 128
          %s497 = scalar_lea.hbm %s4, %s496
          %s498 = sshll.u32 %s485, 4
          %s499 = int_to_ptr.vmem [resolvable:$true] %s498
          %504 = dma.hbm_to_vmem [thread:$0]  %s497, 256, %s499, %s482, 128, 128, 8
        $region48: #{tpu_custom_call.1} parent=31 // pred_fallthru
          _
        // Predicated region
        $region49: #{tpu_custom_call.1} parent=31 // pred_check
          %p505 = pneg %p223
        $region50: #{tpu_custom_call.1} parent=31 // pred_check_branch
          %507 = sbr.rel (%p505) target = $region52
        $region51: #{tpu_custom_call.1} parent=31 // pred_region
          %s508 = sand.u32 %s32, 1
          %s509 = scalar_lea.sflag [#allocation11], %s508
          %s510 = sand.u32 %s213, 1
          %s511 = smul.addr %s510, 16
          %s512 = scalar_lea.vmem [#allocation12], %s511
          %s513 = smul.u32 %s40, 8
          %s514 = sadd.s32 %s513, 8
          %p515 = scmp.lt.s32.totalorder %s514, 15
          %s516 = scalar_select %p515, %s514, 15
          %s518 = ssub.s32 256, 256
          %519 = vsyncadd %s509, %s518
          %s520 = smul.addr %s516, 2
          %s521 = smul.addr %s39, 32
          %s522 = sadd.s32 %s520, %s521
          %s523 = smul.addr %s522, 128
          %s524 = scalar_lea.hbm %s5, %s523
          %s525 = sshll.u32 %s512, 4
          %s526 = int_to_ptr.vmem [resolvable:$true] %s525
          %531 = dma.hbm_to_vmem [thread:$0]  %s524, 256, %s526, %s509, 128, 128, 8
        $region52: #{tpu_custom_call.1} parent=31 // pred_fallthru
          _
        // Predicated region
        $region53: #{tpu_custom_call.1} parent=31 // pred_check
          %p532 = pneg %p259
        $region54: #{tpu_custom_call.1} parent=31 // pred_check_branch
          %534 = sbr.rel (%p532) target = $region56
        $region55: #{tpu_custom_call.1} parent=31 // pred_region
          %s535 = sand.u32 %s32, 1
          %s536 = scalar_lea.sflag [#allocation14], %s535
          %s537 = sand.u32 %s249, 1
          %s538 = smul.addr %s537, 16
          %s539 = scalar_lea.vmem [#allocation13], %s538
          %s540 = smul.u32 %s40, 8
          %s541 = sadd.s32 %s540, 8
          %p542 = scmp.lt.s32.totalorder %s541, 15
          %s543 = scalar_select %p542, %s541, 15
          %s545 = ssub.s32 256, 256
          %546 = vsyncadd %s536, %s545
          %s547 = smul.addr %s543, 2
          %s548 = smul.addr %s39, 32
          %s549 = sadd.s32 %s547, %s548
          %s550 = smul.addr %s549, 128
          %s551 = scalar_lea.hbm %s6, %s550
          %s552 = sshll.u32 %s539, 4
          %s553 = int_to_ptr.vmem [resolvable:$true] %s552
          %558 = dma.hbm_to_vmem [thread:$0]  %s551, 256, %s553, %s536, 128, 128, 8
        $region56: #{tpu_custom_call.1} parent=31 // pred_fallthru
          _
      $region32: #{tpu_custom_call.1} parent=5 // pred_fallthru
        _
      %p559 = scmp.le.s32.totalorder 1, %s32
      %p560 = scmp.lt.s32.totalorder %s32, 5
      %p561 = pnand %p559, %p560
      %p562 = pneg %p561
      // Predicated region
      $region57: #{tpu_custom_call.1} parent=5 // pred_check
        _
      $region58: #{tpu_custom_call.1} parent=5 // pred_check_branch
        %564 = sbr.rel (%p561) target = $region60
      $region59: #{tpu_custom_call.1} parent=5 // pred_region
        %s565 = ssub.s32 %s32, 1
        // Predicated region
        $region61: #{tpu_custom_call.1} parent=59 // pred_check
          %p566 = pneg %p65
        $region62: #{tpu_custom_call.1} parent=59 // pred_check_branch
          %568 = sbr.rel (%p566) target = $region64
        $region63: #{tpu_custom_call.1} parent=59 // pred_region
          %569 = dma.done [#allocation5], 16
        $region64: #{tpu_custom_call.1} parent=59 // pred_fallthru
          _
        %s570 = sand.u32 %s80, 1
        %s571 = scalar_lea.sflag [#allocation3], %s570
        %s572 = sand.u32 %s80, 1
        %s573 = smul.addr %s572, 128
        %s574 = scalar_lea.vmem [#allocation6], %s573
        // Predicated region
        $region65: #{tpu_custom_call.1} parent=59 // pred_check
          %p575 = pneg %p93
        $region66: #{tpu_custom_call.1} parent=59 // pred_check_branch
          %577 = sbr.rel (%p575) target = $region68
        $region67: #{tpu_custom_call.1} parent=59 // pred_region
          %578 = dma.done %s571, 2048
        $region68: #{tpu_custom_call.1} parent=59 // pred_fallthru
          _
        %s579 = sand.u32 %s37, 1
        %s580 = scalar_lea.sflag [#allocation8], %s579
        %s581 = sand.u32 %s108, 1
        %s582 = smul.addr %s581, 128
        %s583 = scalar_lea.vmem [#allocation7], %s582
        // Predicated region
        $region69: #{tpu_custom_call.1} parent=59 // pred_check
          %p584 = pneg %p121
        $region70: #{tpu_custom_call.1} parent=59 // pred_check_branch
          %586 = sbr.rel (%p584) target = $region72
        $region71: #{tpu_custom_call.1} parent=59 // pred_region
          %587 = dma.done %s580, 2048
        $region72: #{tpu_custom_call.1} parent=59 // pred_fallthru
          _
        %s588 = sand.u32 %s37, 1
        %s589 = scalar_lea.sflag [#allocation8], %s588
        %s590 = sand.u32 %s144, 1
        %s591 = smul.addr %s590, 16
        %s592 = scalar_lea.vmem [#allocation9], %s591
        // Predicated region
        $region73: #{tpu_custom_call.1} parent=59 // pred_check
          %p593 = pneg %p157
        $region74: #{tpu_custom_call.1} parent=59 // pred_check_branch
          %595 = sbr.rel (%p593) target = $region76
        $region75: #{tpu_custom_call.1} parent=59 // pred_region
          %596 = dma.done %s589, 256
        $region76: #{tpu_custom_call.1} parent=59 // pred_fallthru
          _
        %s597 = sand.u32 %s37, 1
        %s598 = scalar_lea.sflag [#allocation11], %s597
        %s599 = sand.u32 %s180, 1
        %s600 = smul.addr %s599, 16
        %s601 = scalar_lea.vmem [#allocation10], %s600
        // Predicated region
        $region77: #{tpu_custom_call.1} parent=59 // pred_check
          %p602 = pneg %p193
        $region78: #{tpu_custom_call.1} parent=59 // pred_check_branch
          %604 = sbr.rel (%p602) target = $region80
        $region79: #{tpu_custom_call.1} parent=59 // pred_region
          %605 = dma.done %s598, 256
        $region80: #{tpu_custom_call.1} parent=59 // pred_fallthru
          _
        %s606 = sand.u32 %s37, 1
        %s607 = scalar_lea.sflag [#allocation11], %s606
        %s608 = sand.u32 %s216, 1
        %s609 = smul.addr %s608, 16
        %s610 = scalar_lea.vmem [#allocation12], %s609
        // Predicated region
        $region81: #{tpu_custom_call.1} parent=59 // pred_check
          %p611 = pneg %p229
        $region82: #{tpu_custom_call.1} parent=59 // pred_check_branch
          %613 = sbr.rel (%p611) target = $region84
        $region83: #{tpu_custom_call.1} parent=59 // pred_region
          %614 = dma.done %s607, 256
        $region84: #{tpu_custom_call.1} parent=59 // pred_fallthru
          _
        %s615 = sand.u32 %s37, 1
        %s616 = scalar_lea.sflag [#allocation14], %s615
        %s617 = sand.u32 %s252, 1
        %s618 = smul.addr %s617, 16
        %s619 = scalar_lea.vmem [#allocation13], %s618
        // Predicated region
        $region85: #{tpu_custom_call.1} parent=59 // pred_check
          %p620 = pneg %p265
        $region86: #{tpu_custom_call.1} parent=59 // pred_check_branch
          %622 = sbr.rel (%p620) target = $region88
        $region87: #{tpu_custom_call.1} parent=59 // pred_region
          %623 = dma.done %s616, 256
        $region88: #{tpu_custom_call.1} parent=59 // pred_fallthru
          _
        // Predicated region
        $region89: #{tpu_custom_call.1} parent=59 // pred_check
          %p624 = pneg %p307
        $region90: #{tpu_custom_call.1} parent=59 // pred_check_branch
          %626 = sbr.rel (%p624) target = $region92
        $region91: #{tpu_custom_call.1} parent=59 // pred_region
          %627 = dma.done [#allocation14], 512
        $region92: #{tpu_custom_call.1} parent=59 // pred_fallthru
          _
        %628 = sfence
        %p629 = pneg %p65
        %p630 = pneg %p62
        %s631 = sand.u32 %s80, 1
        %s632 = scalar_lea.sflag [#allocation3], %s631
        %s633 = sand.u32 %s80, 1
        %s634 = smul.addr %s633, 128
        %s635 = scalar_lea.vmem [#allocation6], %s634
        %p636 = pneg %p93
        %p637 = pneg %p90
        %s638 = sand.u32 %s37, 1
        %s639 = scalar_lea.sflag [#allocation8], %s638
        %s640 = sand.u32 %s108, 1
        %s641 = smul.addr %s640, 128
        %s642 = scalar_lea.vmem [#allocation7], %s641
        %p643 = pneg %p121
        %p644 = pneg %p118
        %s645 = sand.u32 %s37, 1
        %s646 = scalar_lea.sflag [#allocation8], %s645
        %s647 = sand.u32 %s144, 1
        %s648 = smul.addr %s647, 16
        %s649 = scalar_lea.vmem [#allocation9], %s648
        %p650 = pneg %p157
        %p651 = pneg %p154
        %s652 = sand.u32 %s37, 1
        %s653 = scalar_lea.sflag [#allocation11], %s652
        %s654 = sand.u32 %s180, 1
        %s655 = smul.addr %s654, 16
        %s656 = scalar_lea.vmem [#allocation10], %s655
        %p657 = pneg %p193
        %p658 = pneg %p190
        %s659 = sand.u32 %s37, 1
        %s660 = scalar_lea.sflag [#allocation11], %s659
        %s661 = sand.u32 %s216, 1
        %s662 = smul.addr %s661, 16
        %s663 = scalar_lea.vmem [#allocation12], %s662
        %p664 = pneg %p229
        %p665 = pneg %p226
        %s666 = sand.u32 %s37, 1
        %s667 = scalar_lea.sflag [#allocation14], %s666
        %s668 = sand.u32 %s252, 1
        %s669 = smul.addr %s668, 16
        %s670 = scalar_lea.vmem [#allocation13], %s669
        %p671 = pneg %p265
        %p672 = pneg %p262
        %p673 = pneg %p286
        %p674 = pneg %p283
        %p675 = pneg %p307
        %p676 = pneg %p304
        %p677 = pneg %p328
        %p678 = pneg %p325
        %p679 = pneg %p356
        %p680 = pneg %p353
        %s681 = sand.u32 %s343, 1
        %s682 = scalar_lea.sflag [#allocation4], %s681
        %s683 = sand.u32 %s343, 1
        %s684 = smul.addr %s683, 128
        %s685 = scalar_lea.vmem [#allocation16], %s684
        %s686 = smul.u32 8, %s42
        %s687 = smul.u32 8, %s42
        %s688 = smul.u32 %s42, 8
        %s689 = ssub.s32 %s688, 1
        %p690 = scmp.gt.s32.totalorder %s689, 0
        %s691 = scalar_select %p690, %s689, 0
        %s692 = smul.u32 %s42, 8
        %s693 = ssub.s32 %s692, 1
        %p694 = scmp.gt.s32.totalorder %s693, 0
        %s695 = scalar_select %p694, %s693, 0
        %s696 = smul.u32 %s42, 8
        %s697 = sadd.s32 %s696, 8
        %p698 = scmp.lt.s32.totalorder %s697, 15
        %s699 = scalar_select %p698, %s697, 15
        %s700 = smul.u32 %s42, 8
        %s701 = sadd.s32 %s700, 8
        %p702 = scmp.lt.s32.totalorder %s701, 15
        %s703 = scalar_select %p702, %s701, 15
        %s704 = smul.u32 8, %s42
        %v705 = vld [vmem:[%s574] sm:$0xff]
        %v706 = vld [vmem:[%s574 + $0x8] sm:$0xff]
        %v707 = vld [vmem:[%s574 + $0x10] sm:$0xff]
        %v708 = vld [vmem:[%s574 + $0x18] sm:$0xff]
        %v709 = vld [vmem:[%s574 + $0x20] sm:$0xff]
        %v710 = vld [vmem:[%s574 + $0x28] sm:$0xff]
        %v711 = vld [vmem:[%s574 + $0x30] sm:$0xff]
        %v712 = vld [vmem:[%s574 + $0x38] sm:$0xff]
        %v713 = vld [vmem:[%s574 + $0x40] sm:$0xff]
        %v714 = vld [vmem:[%s574 + $0x48] sm:$0xff]
        %v715 = vld [vmem:[%s574 + $0x50] sm:$0xff]
        %v716 = vld [vmem:[%s574 + $0x58] sm:$0xff]
        %v717 = vld [vmem:[%s574 + $0x60] sm:$0xff]
        %v718 = vld [vmem:[%s574 + $0x68] sm:$0xff]
        %v719 = vld [vmem:[%s574 + $0x70] sm:$0xff]
        %v720 = vld [vmem:[%s574 + $0x78] sm:$0xff]
        %s721 = sld [smem:[#allocation2]]
        %v722 = vstv %s721
        %v723 = vmul.f32 %v705, %v722
        %v724 = vmul.f32 %v706, %v722
        %v725 = vmul.f32 %v707, %v722
        %v726 = vmul.f32 %v708, %v722
        %v727 = vmul.f32 %v709, %v722
        %v728 = vmul.f32 %v710, %v722
        %v729 = vmul.f32 %v711, %v722
        %v730 = vmul.f32 %v712, %v722
        %v731 = vmul.f32 %v713, %v722
        %v732 = vmul.f32 %v714, %v722
        %v733 = vmul.f32 %v715, %v722
        %v734 = vmul.f32 %v716, %v722
        %v735 = vmul.f32 %v717, %v722
        %v736 = vmul.f32 %v718, %v722
        %v737 = vmul.f32 %v719, %v722
        %v738 = vmul.f32 %v720, %v722
        %v739 = vld [vmem:[%s583] sm:$0xff]
        %v740 = vld [vmem:[%s583 + $0x8] sm:$0xff]
        %v741 = vld [vmem:[%s583 + $0x10] sm:$0xff]
        %v742 = vld [vmem:[%s583 + $0x18] sm:$0xff]
        %v743 = vld [vmem:[%s583 + $0x20] sm:$0xff]
        %v744 = vld [vmem:[%s583 + $0x28] sm:$0xff]
        %v745 = vld [vmem:[%s583 + $0x30] sm:$0xff]
        %v746 = vld [vmem:[%s583 + $0x38] sm:$0xff]
        %v747 = vld [vmem:[%s583 + $0x40] sm:$0xff]
        %v748 = vld [vmem:[%s583 + $0x48] sm:$0xff]
        %v749 = vld [vmem:[%s583 + $0x50] sm:$0xff]
        %v750 = vld [vmem:[%s583 + $0x58] sm:$0xff]
        %v751 = vld [vmem:[%s583 + $0x60] sm:$0xff]
        %v752 = vld [vmem:[%s583 + $0x68] sm:$0xff]
        %v753 = vld [vmem:[%s583 + $0x70] sm:$0xff]
        %v754 = vld [vmem:[%s583 + $0x78] sm:$0xff]
        %s755 = sld [smem:[#allocation2 + $0x1]]
        %v756 = vstv %s755
        %v757 = vmul.f32 %v739, %v756
        %v758 = vmul.f32 %v740, %v756
        %v759 = vmul.f32 %v741, %v756
        %v760 = vmul.f32 %v742, %v756
        %v761 = vmul.f32 %v743, %v756
        %v762 = vmul.f32 %v744, %v756
        %v763 = vmul.f32 %v745, %v756
        %v764 = vmul.f32 %v746, %v756
        %v765 = vmul.f32 %v747, %v756
        %v766 = vmul.f32 %v748, %v756
        %v767 = vmul.f32 %v749, %v756
        %v768 = vmul.f32 %v750, %v756
        %v769 = vmul.f32 %v751, %v756
        %v770 = vmul.f32 %v752, %v756
        %v771 = vmul.f32 %v753, %v756
        %v772 = vmul.f32 %v754, %v756
        %v773 = vadd.f32 %v723, %v757
        %v774 = vadd.f32 %v724, %v758
        %v775 = vadd.f32 %v725, %v759
        %v776 = vadd.f32 %v726, %v760
        %v777 = vadd.f32 %v727, %v761
        %v778 = vadd.f32 %v728, %v762
        %v779 = vadd.f32 %v729, %v763
        %v780 = vadd.f32 %v730, %v764
        %v781 = vadd.f32 %v731, %v765
        %v782 = vadd.f32 %v732, %v766
        %v783 = vadd.f32 %v733, %v767
        %v784 = vadd.f32 %v734, %v768
        %v785 = vadd.f32 %v735, %v769
        %v786 = vadd.f32 %v736, %v770
        %v787 = vadd.f32 %v737, %v771
        %v788 = vadd.f32 %v738, %v772
        %v789 = vxor.u32 %v773, 2147483648
        %v790 = vxor.u32 %v774, 2147483648
        %v791 = vxor.u32 %v775, 2147483648
        %v792 = vxor.u32 %v776, 2147483648
        %v793 = vxor.u32 %v777, 2147483648
        %v794 = vxor.u32 %v778, 2147483648
        %v795 = vxor.u32 %v779, 2147483648
        %v796 = vxor.u32 %v780, 2147483648
        %v797 = vxor.u32 %v781, 2147483648
        %v798 = vxor.u32 %v782, 2147483648
        %v799 = vxor.u32 %v783, 2147483648
        %v800 = vxor.u32 %v784, 2147483648
        %v801 = vxor.u32 %v785, 2147483648
        %v802 = vxor.u32 %v786, 2147483648
        %v803 = vxor.u32 %v787, 2147483648
        %v804 = vxor.u32 %v788, 2147483648
        %v805 = vmul.f32 %v789, 1.442695
        %v806 = vpow.pop %v805
        %v807 = vmul.f32 %v790, 1.442695
        %v808 = vpow.pop %v807
        %v809 = vmul.f32 %v791, 1.442695
        %v810 = vpow.pop %v809
        %v811 = vmul.f32 %v792, 1.442695
        %v812 = vpow.pop %v811
        %v813 = vmul.f32 %v793, 1.442695
        %v814 = vpow.pop %v813
        %v815 = vmul.f32 %v794, 1.442695
        %v816 = vpow.pop %v815
        %v817 = vmul.f32 %v795, 1.442695
        %v818 = vpow.pop %v817
        %v819 = vmul.f32 %v796, 1.442695
        %v820 = vpow.pop %v819
        %v821 = vmul.f32 %v797, 1.442695
        %v822 = vpow.pop %v821
        %v823 = vmul.f32 %v798, 1.442695
        %v824 = vpow.pop %v823
        %v825 = vmul.f32 %v799, 1.442695
        %v826 = vpow.pop %v825
        %v827 = vmul.f32 %v800, 1.442695
        %v828 = vpow.pop %v827
        %v829 = vmul.f32 %v801, 1.442695
        %v830 = vpow.pop %v829
        %v831 = vmul.f32 %v802, 1.442695
        %v832 = vpow.pop %v831
        %v833 = vmul.f32 %v803, 1.442695
        %v834 = vpow.pop %v833
        %v835 = vmul.f32 %v804, 1.442695
        %v836 = vpow.pop %v835
        %v837 = vadd.f32 %v806, 1.0
        %v838 = vadd.f32 %v808, 1.0
        %v839 = vadd.f32 %v810, 1.0
        %v840 = vadd.f32 %v812, 1.0
        %v841 = vadd.f32 %v814, 1.0
        %v842 = vadd.f32 %v816, 1.0
        %v843 = vadd.f32 %v818, 1.0
        %v844 = vadd.f32 %v820, 1.0
        %v845 = vadd.f32 %v822, 1.0
        %v846 = vadd.f32 %v824, 1.0
        %v847 = vadd.f32 %v826, 1.0
        %v848 = vadd.f32 %v828, 1.0
        %v849 = vadd.f32 %v830, 1.0
        %v850 = vadd.f32 %v832, 1.0
        %v851 = vadd.f32 %v834, 1.0
        %v852 = vadd.f32 %v836, 1.0
        %v853 = vrcp.pop %v837
        %v854 = vmul.f32 1.0, %v853
        %v855 = vrcp.pop %v838
        %v856 = vmul.f32 1.0, %v855
        %v857 = vrcp.pop %v839
        %v858 = vmul.f32 1.0, %v857
        %v859 = vrcp.pop %v840
        %v860 = vmul.f32 1.0, %v859
        %v861 = vrcp.pop %v841
        %v862 = vmul.f32 1.0, %v861
        %v863 = vrcp.pop %v842
        %v864 = vmul.f32 1.0, %v863
        %v865 = vrcp.pop %v843
        %v866 = vmul.f32 1.0, %v865
        %v867 = vrcp.pop %v844
        %v868 = vmul.f32 1.0, %v867
        %v869 = vrcp.pop %v845
        %v870 = vmul.f32 1.0, %v869
        %v871 = vrcp.pop %v846
        %v872 = vmul.f32 1.0, %v871
        %v873 = vrcp.pop %v847
        %v874 = vmul.f32 1.0, %v873
        %v875 = vrcp.pop %v848
        %v876 = vmul.f32 1.0, %v875
        %v877 = vrcp.pop %v849
        %v878 = vmul.f32 1.0, %v877
        %v879 = vrcp.pop %v850
        %v880 = vmul.f32 1.0, %v879
        %v881 = vrcp.pop %v851
        %v882 = vmul.f32 1.0, %v881
        %v883 = vrcp.pop %v852
        %v884 = vmul.f32 1.0, %v883
        %v885 = vmul.f32 %v773, %v854
        %v886 = vmul.f32 %v774, %v856
        %v887 = vmul.f32 %v775, %v858
        %v888 = vmul.f32 %v776, %v860
        %v889 = vmul.f32 %v777, %v862
        %v890 = vmul.f32 %v778, %v864
        %v891 = vmul.f32 %v779, %v866
        %v892 = vmul.f32 %v780, %v868
        %v893 = vmul.f32 %v781, %v870
        %v894 = vmul.f32 %v782, %v872
        %v895 = vmul.f32 %v783, %v874
        %v896 = vmul.f32 %v784, %v876
        %v897 = vmul.f32 %v785, %v878
        %v898 = vmul.f32 %v786, %v880
        %v899 = vmul.f32 %v787, %v882
        %v900 = vmul.f32 %v788, %v884
        %v901 = vld [vmem:[%s592] sm:$0xff]
        %v902 = vld [vmem:[%s592 + $0x8] sm:$0xff]
        %v903 = vmul.f32 %v901, %v722
        %v904 = vmul.f32 %v902, %v722
        %v905 = vld [vmem:[%s601] sm:$0xff]
        %v906 = vld [vmem:[%s601 + $0x8] sm:$0xff]
        %v907 = vmul.f32 %v905, %v756
        %v908 = vmul.f32 %v906, %v756
        %v909 = vadd.f32 %v903, %v907
        %v910 = vadd.f32 %v904, %v908
        %v911 = vxor.u32 %v909, 2147483648
        %v912 = vxor.u32 %v910, 2147483648
        %v913 = vmul.f32 %v911, 1.442695
        %v914 = vpow.pop %v913
        %v915 = vmul.f32 %v912, 1.442695
        %v916 = vpow.pop %v915
        %v917 = vadd.f32 %v914, 1.0
        %v918 = vadd.f32 %v916, 1.0
        %v919 = vrcp.pop %v917
        %v920 = vmul.f32 1.0, %v919
        %v921 = vrcp.pop %v918
        %v922 = vmul.f32 1.0, %v921
        %v923 = vmul.f32 %v909, %v920
        %v924 = vmul.f32 %v910, %v922
        %p925 = scmp.gt.s32.totalorder %s42, 0
        %s926 = scalar_select %p925, 1, 0
        %s927 = scvt.s32.f32 %s926
        %v928 = vstv %s927
        %v929 = vmul.f32 %v923, %v928
        %v930 = vmul.f32 %v924, %v928
        %v931 = vld [vmem:[%s610] sm:$0xff]
        %v932 = vld [vmem:[%s610 + $0x8] sm:$0xff]
        %v933 = vmul.f32 %v931, %v722
        %v934 = vmul.f32 %v932, %v722
        %v935 = vld [vmem:[%s619] sm:$0xff]
        %v936 = vld [vmem:[%s619 + $0x8] sm:$0xff]
        %v937 = vmul.f32 %v935, %v756
        %v938 = vmul.f32 %v936, %v756
        %v939 = vadd.f32 %v933, %v937
        %v940 = vadd.f32 %v934, %v938
        %v941 = vxor.u32 %v939, 2147483648
        %v942 = vxor.u32 %v940, 2147483648
        %v943 = vmul.f32 %v941, 1.442695
        %v944 = vpow.pop %v943
        %v945 = vmul.f32 %v942, 1.442695
        %v946 = vpow.pop %v945
        %v947 = vadd.f32 %v944, 1.0
        %v948 = vadd.f32 %v946, 1.0
        %v949 = vrcp.pop %v947
        %v950 = vmul.f32 1.0, %v949
        %v951 = vrcp.pop %v948
        %v952 = vmul.f32 1.0, %v951
        %v953 = vmul.f32 %v939, %v950
        %v954 = vmul.f32 %v940, %v952
        %p955 = scmp.lt.s32.totalorder %s42, 1
        %s956 = scalar_select %p955, 1, 0
        %s957 = scvt.s32.f32 %s956
        %v958 = vstv %s957
        %v959 = vmul.f32 %v953, %v958
        %v960 = vmul.f32 %v954, %v958
        %vm981 = vcmask 1040384
        %v982 = vrot.slane %v929, 7
        %v983 = vrot.slane %v930, 7
        %v984 = vsel %vm981, %v982, %v983
        %v985 = vrot.slane %v885, 7
        %v986 = vrot.slane %v886, 7
        %v987 = vsel %vm981, %v985, %v986
        %v988 = vrot.slane %v887, 7
        %v989 = vrot.slane %v888, 7
        %v990 = vsel %vm981, %v988, %v989
        %v991 = vrot.slane %v889, 7
        %v992 = vrot.slane %v890, 7
        %v993 = vsel %vm981, %v991, %v992
        %v994 = vrot.slane %v891, 7
        %v995 = vrot.slane %v892, 7
        %v996 = vsel %vm981, %v994, %v995
        %v997 = vrot.slane %v893, 7
        %v998 = vrot.slane %v894, 7
        %v999 = vsel %vm981, %v997, %v998
        %v1000 = vrot.slane %v895, 7
        %v1001 = vrot.slane %v896, 7
        %v1002 = vsel %vm981, %v1000, %v1001
        %v1003 = vrot.slane %v897, 7
        %v1004 = vrot.slane %v898, 7
        %v1005 = vsel %vm981, %v1003, %v1004
        %v1006 = vrot.slane %v899, 7
        %v1007 = vrot.slane %v900, 7
        %v1008 = vsel %vm981, %v1006, %v1007
        %v1009 = vrot.slane %v959, 7
        %v1010 = vrot.slane %v960, 7
        %v1011 = vsel %vm981, %v1009, %v1010
        %v1032 = vsel %vm981, 0.0, %v982
        %v1033 = vsel %vm981, 0.0, %v985
        %v1034 = vsel %vm981, 0.0, %v988
        %v1035 = vsel %vm981, 0.0, %v991
        %v1036 = vsel %vm981, 0.0, %v994
        %v1037 = vsel %vm981, 0.0, %v997
        %v1038 = vsel %vm981, 0.0, %v1000
        %v1039 = vsel %vm981, 0.0, %v1003
        %v1040 = vsel %vm981, 0.0, %v1006
        %v1041 = vsel %vm981, 0.0, %v1009
        %vm1042 = vcmask 1046528
        %v1043 = vrot.slane %v929, 1
        %v1044 = vrot.slane %v930, 1
        %v1045 = vsel %vm1042, %v1043, %v1044
        %v1046 = vrot.slane %v885, 1
        %v1047 = vrot.slane %v886, 1
        %v1048 = vsel %vm1042, %v1046, %v1047
        %v1049 = vrot.slane %v887, 1
        %v1050 = vrot.slane %v888, 1
        %v1051 = vsel %vm1042, %v1049, %v1050
        %v1052 = vrot.slane %v889, 1
        %v1053 = vrot.slane %v890, 1
        %v1054 = vsel %vm1042, %v1052, %v1053
        %v1055 = vrot.slane %v891, 1
        %v1056 = vrot.slane %v892, 1
        %v1057 = vsel %vm1042, %v1055, %v1056
        %v1058 = vrot.slane %v893, 1
        %v1059 = vrot.slane %v894, 1
        %v1060 = vsel %vm1042, %v1058, %v1059
        %v1061 = vrot.slane %v895, 1
        %v1062 = vrot.slane %v896, 1
        %v1063 = vsel %vm1042, %v1061, %v1062
        %v1064 = vrot.slane %v897, 1
        %v1065 = vrot.slane %v898, 1
        %v1066 = vsel %vm1042, %v1064, %v1065
        %v1067 = vrot.slane %v899, 1
        %v1068 = vrot.slane %v900, 1
        %v1069 = vsel %vm1042, %v1067, %v1068
        %v1070 = vrot.slane %v959, 1
        %v1071 = vrot.slane %v960, 1
        %v1072 = vsel %vm1042, %v1070, %v1071
        %v1093 = vsel %vm1042, %v1044, 0.0
        %v1094 = vsel %vm1042, %v1047, 0.0
        %v1095 = vsel %vm1042, %v1050, 0.0
        %v1096 = vsel %vm1042, %v1053, 0.0
        %v1097 = vsel %vm1042, %v1056, 0.0
        %v1098 = vsel %vm1042, %v1059, 0.0
        %v1099 = vsel %vm1042, %v1062, 0.0
        %v1100 = vsel %vm1042, %v1065, 0.0
        %v1101 = vsel %vm1042, %v1068, 0.0
        %v1102 = vsel %vm1042, %v1071, 0.0
        %v1103 = vld [vmem:[%s7] sm:$0xff]
        %v1104 = vld [vmem:[%s7 + $0x8] sm:$0x1]
        %v1105 = vlaneseq
        %v1106 = vshrl.u32 %v1105, 7
        %v1107 = vsub.s32 0, %v1106
        %v1108 = vrot.slane %v1103, %v1107
        %v1109 = vmul.f32 %v1032, %v1108
        %v1110 = vmul.f32 %v984, %v1108
        %v1111 = vmul.f32 %v1033, %v1108
        %v1112 = vmul.f32 %v987, %v1108
        %v1113 = vmul.f32 %v1034, %v1108
        %v1114 = vmul.f32 %v990, %v1108
        %v1115 = vmul.f32 %v1035, %v1108
        %v1116 = vmul.f32 %v993, %v1108
        %v1117 = vmul.f32 %v1036, %v1108
        %v1118 = vmul.f32 %v996, %v1108
        %v1119 = vmul.f32 %v1037, %v1108
        %v1120 = vmul.f32 %v999, %v1108
        %v1121 = vmul.f32 %v1038, %v1108
        %v1122 = vmul.f32 %v1002, %v1108
        %v1123 = vmul.f32 %v1039, %v1108
        %v1124 = vmul.f32 %v1005, %v1108
        %v1125 = vlaneseq
        %v1126 = vshrl.u32 %v1125, 7
        %v1127 = vsub.s32 1, %v1126
        %v1128 = vrot.slane %v1103, %v1127
        %v1129 = vmul.f32 %v929, %v1128
        %v1130 = vmul.f32 %v930, %v1128
        %v1131 = vmul.f32 %v885, %v1128
        %v1132 = vmul.f32 %v886, %v1128
        %v1133 = vmul.f32 %v887, %v1128
        %v1134 = vmul.f32 %v888, %v1128
        %v1135 = vmul.f32 %v889, %v1128
        %v1136 = vmul.f32 %v890, %v1128
        %v1137 = vmul.f32 %v891, %v1128
        %v1138 = vmul.f32 %v892, %v1128
        %v1139 = vmul.f32 %v893, %v1128
        %v1140 = vmul.f32 %v894, %v1128
        %v1141 = vmul.f32 %v895, %v1128
        %v1142 = vmul.f32 %v896, %v1128
        %v1143 = vmul.f32 %v897, %v1128
        %v1144 = vmul.f32 %v898, %v1128
        %v1145 = vadd.f32 %v1109, %v1129
        %v1146 = vadd.f32 %v1110, %v1130
        %v1147 = vadd.f32 %v1111, %v1131
        %v1148 = vadd.f32 %v1112, %v1132
        %v1149 = vadd.f32 %v1113, %v1133
        %v1150 = vadd.f32 %v1114, %v1134
        %v1151 = vadd.f32 %v1115, %v1135
        %v1152 = vadd.f32 %v1116, %v1136
        %v1153 = vadd.f32 %v1117, %v1137
        %v1154 = vadd.f32 %v1118, %v1138
        %v1155 = vadd.f32 %v1119, %v1139
        %v1156 = vadd.f32 %v1120, %v1140
        %v1157 = vadd.f32 %v1121, %v1141
        %v1158 = vadd.f32 %v1122, %v1142
        %v1159 = vadd.f32 %v1123, %v1143
        %v1160 = vadd.f32 %v1124, %v1144
        %v1161 = vlaneseq
        %v1162 = vshrl.u32 %v1161, 7
        %v1163 = vsub.s32 2, %v1162
        %v1164 = vrot.slane %v1103, %v1163
        %v1165 = vmul.f32 %v1045, %v1164
        %v1166 = vmul.f32 %v1093, %v1164
        %v1167 = vmul.f32 %v1048, %v1164
        %v1168 = vmul.f32 %v1094, %v1164
        %v1169 = vmul.f32 %v1051, %v1164
        %v1170 = vmul.f32 %v1095, %v1164
        %v1171 = vmul.f32 %v1054, %v1164
        %v1172 = vmul.f32 %v1096, %v1164
        %v1173 = vmul.f32 %v1057, %v1164
        %v1174 = vmul.f32 %v1097, %v1164
        %v1175 = vmul.f32 %v1060, %v1164
        %v1176 = vmul.f32 %v1098, %v1164
        %v1177 = vmul.f32 %v1063, %v1164
        %v1178 = vmul.f32 %v1099, %v1164
        %v1179 = vmul.f32 %v1066, %v1164
        %v1180 = vmul.f32 %v1100, %v1164
        %v1181 = vadd.f32 %v1145, %v1165
        %v1182 = vadd.f32 %v1146, %v1166
        %v1183 = vadd.f32 %v1147, %v1167
        %v1184 = vadd.f32 %v1148, %v1168
        %v1185 = vadd.f32 %v1149, %v1169
        %v1186 = vadd.f32 %v1150, %v1170
        %v1187 = vadd.f32 %v1151, %v1171
        %v1188 = vadd.f32 %v1152, %v1172
        %v1189 = vadd.f32 %v1153, %v1173
        %v1190 = vadd.f32 %v1154, %v1174
        %v1191 = vadd.f32 %v1155, %v1175
        %v1192 = vadd.f32 %v1156, %v1176
        %v1193 = vadd.f32 %v1157, %v1177
        %v1194 = vadd.f32 %v1158, %v1178
        %v1195 = vadd.f32 %v1159, %v1179
        %v1196 = vadd.f32 %v1160, %v1180
        %v1197 = vlaneseq
        %v1198 = vshrl.u32 %v1197, 7
        %v1199 = vsub.s32 3, %v1198
        %v1200 = vrot.slane %v1103, %v1199
        %v1201 = vmul.f32 %v1033, %v1200
        %v1202 = vmul.f32 %v987, %v1200
        %v1203 = vmul.f32 %v1034, %v1200
        %v1204 = vmul.f32 %v990, %v1200
        %v1205 = vmul.f32 %v1035, %v1200
        %v1206 = vmul.f32 %v993, %v1200
        %v1207 = vmul.f32 %v1036, %v1200
        %v1208 = vmul.f32 %v996, %v1200
        %v1209 = vmul.f32 %v1037, %v1200
        %v1210 = vmul.f32 %v999, %v1200
        %v1211 = vmul.f32 %v1038, %v1200
        %v1212 = vmul.f32 %v1002, %v1200
        %v1213 = vmul.f32 %v1039, %v1200
        %v1214 = vmul.f32 %v1005, %v1200
        %v1215 = vmul.f32 %v1040, %v1200
        %v1216 = vmul.f32 %v1008, %v1200
        %v1217 = vadd.f32 %v1181, %v1201
        %v1218 = vadd.f32 %v1182, %v1202
        %v1219 = vadd.f32 %v1183, %v1203
        %v1220 = vadd.f32 %v1184, %v1204
        %v1221 = vadd.f32 %v1185, %v1205
        %v1222 = vadd.f32 %v1186, %v1206
        %v1223 = vadd.f32 %v1187, %v1207
        %v1224 = vadd.f32 %v1188, %v1208
        %v1225 = vadd.f32 %v1189, %v1209
        %v1226 = vadd.f32 %v1190, %v1210
        %v1227 = vadd.f32 %v1191, %v1211
        %v1228 = vadd.f32 %v1192, %v1212
        %v1229 = vadd.f32 %v1193, %v1213
        %v1230 = vadd.f32 %v1194, %v1214
        %v1231 = vadd.f32 %v1195, %v1215
        %v1232 = vadd.f32 %v1196, %v1216
        %v1233 = vlaneseq
        %v1234 = vshrl.u32 %v1233, 7
        %v1235 = vsub.s32 4, %v1234
        %v1236 = vrot.slane %v1103, %v1235
        %v1237 = vmul.f32 %v885, %v1236
        %v1238 = vmul.f32 %v886, %v1236
        %v1239 = vmul.f32 %v887, %v1236
        %v1240 = vmul.f32 %v888, %v1236
        %v1241 = vmul.f32 %v889, %v1236
        %v1242 = vmul.f32 %v890, %v1236
        %v1243 = vmul.f32 %v891, %v1236
        %v1244 = vmul.f32 %v892, %v1236
        %v1245 = vmul.f32 %v893, %v1236
        %v1246 = vmul.f32 %v894, %v1236
        %v1247 = vmul.f32 %v895, %v1236
        %v1248 = vmul.f32 %v896, %v1236
        %v1249 = vmul.f32 %v897, %v1236
        %v1250 = vmul.f32 %v898, %v1236
        %v1251 = vmul.f32 %v899, %v1236
        %v1252 = vmul.f32 %v900, %v1236
        %v1253 = vadd.f32 %v1217, %v1237
        %v1254 = vadd.f32 %v1218, %v1238
        %v1255 = vadd.f32 %v1219, %v1239
        %v1256 = vadd.f32 %v1220, %v1240
        %v1257 = vadd.f32 %v1221, %v1241
        %v1258 = vadd.f32 %v1222, %v1242
        %v1259 = vadd.f32 %v1223, %v1243
        %v1260 = vadd.f32 %v1224, %v1244
        %v1261 = vadd.f32 %v1225, %v1245
        %v1262 = vadd.f32 %v1226, %v1246
        %v1263 = vadd.f32 %v1227, %v1247
        %v1264 = vadd.f32 %v1228, %v1248
        %v1265 = vadd.f32 %v1229, %v1249
        %v1266 = vadd.f32 %v1230, %v1250
        %v1267 = vadd.f32 %v1231, %v1251
        %v1268 = vadd.f32 %v1232, %v1252
        %v1269 = vlaneseq
        %v1270 = vshrl.u32 %v1269, 7
        %v1271 = vsub.s32 5, %v1270
        %v1272 = vrot.slane %v1103, %v1271
        %v1273 = vmul.f32 %v1048, %v1272
        %v1274 = vmul.f32 %v1094, %v1272
        %v1275 = vmul.f32 %v1051, %v1272
        %v1276 = vmul.f32 %v1095, %v1272
        %v1277 = vmul.f32 %v1054, %v1272
        %v1278 = vmul.f32 %v1096, %v1272
        %v1279 = vmul.f32 %v1057, %v1272
        %v1280 = vmul.f32 %v1097, %v1272
        %v1281 = vmul.f32 %v1060, %v1272
        %v1282 = vmul.f32 %v1098, %v1272
        %v1283 = vmul.f32 %v1063, %v1272
        %v1284 = vmul.f32 %v1099, %v1272
        %v1285 = vmul.f32 %v1066, %v1272
        %v1286 = vmul.f32 %v1100, %v1272
        %v1287 = vmul.f32 %v1069, %v1272
        %v1288 = vmul.f32 %v1101, %v1272
        %v1289 = vadd.f32 %v1253, %v1273
        %v1290 = vadd.f32 %v1254, %v1274
        %v1291 = vadd.f32 %v1255, %v1275
        %v1292 = vadd.f32 %v1256, %v1276
        %v1293 = vadd.f32 %v1257, %v1277
        %v1294 = vadd.f32 %v1258, %v1278
        %v1295 = vadd.f32 %v1259, %v1279
        %v1296 = vadd.f32 %v1260, %v1280
        %v1297 = vadd.f32 %v1261, %v1281
        %v1298 = vadd.f32 %v1262, %v1282
        %v1299 = vadd.f32 %v1263, %v1283
        %v1300 = vadd.f32 %v1264, %v1284
        %v1301 = vadd.f32 %v1265, %v1285
        %v1302 = vadd.f32 %v1266, %v1286
        %v1303 = vadd.f32 %v1267, %v1287
        %v1304 = vadd.f32 %v1268, %v1288
        %v1305 = vlaneseq
        %v1306 = vshrl.u32 %v1305, 7
        %v1307 = vsub.s32 6, %v1306
        %v1308 = vrot.slane %v1103, %v1307
        %v1309 = vmul.f32 %v1034, %v1308
        %v1310 = vmul.f32 %v990, %v1308
        %v1311 = vmul.f32 %v1035, %v1308
        %v1312 = vmul.f32 %v993, %v1308
        %v1313 = vmul.f32 %v1036, %v1308
        %v1314 = vmul.f32 %v996, %v1308
        %v1315 = vmul.f32 %v1037, %v1308
        %v1316 = vmul.f32 %v999, %v1308
        %v1317 = vmul.f32 %v1038, %v1308
        %v1318 = vmul.f32 %v1002, %v1308
        %v1319 = vmul.f32 %v1039, %v1308
        %v1320 = vmul.f32 %v1005, %v1308
        %v1321 = vmul.f32 %v1040, %v1308
        %v1322 = vmul.f32 %v1008, %v1308
        %v1323 = vmul.f32 %v1041, %v1308
        %v1324 = vmul.f32 %v1011, %v1308
        %v1325 = vadd.f32 %v1289, %v1309
        %v1326 = vadd.f32 %v1290, %v1310
        %v1327 = vadd.f32 %v1291, %v1311
        %v1328 = vadd.f32 %v1292, %v1312
        %v1329 = vadd.f32 %v1293, %v1313
        %v1330 = vadd.f32 %v1294, %v1314
        %v1331 = vadd.f32 %v1295, %v1315
        %v1332 = vadd.f32 %v1296, %v1316
        %v1333 = vadd.f32 %v1297, %v1317
        %v1334 = vadd.f32 %v1298, %v1318
        %v1335 = vadd.f32 %v1299, %v1319
        %v1336 = vadd.f32 %v1300, %v1320
        %v1337 = vadd.f32 %v1301, %v1321
        %v1338 = vadd.f32 %v1302, %v1322
        %v1339 = vadd.f32 %v1303, %v1323
        %v1340 = vadd.f32 %v1304, %v1324
        %v1341 = vlaneseq
        %v1342 = vshrl.u32 %v1341, 7
        %v1343 = vsub.s32 7, %v1342
        %v1344 = vrot.slane %v1103, %v1343
        %v1345 = vmul.f32 %v887, %v1344
        %v1346 = vmul.f32 %v888, %v1344
        %v1347 = vmul.f32 %v889, %v1344
        %v1348 = vmul.f32 %v890, %v1344
        %v1349 = vmul.f32 %v891, %v1344
        %v1350 = vmul.f32 %v892, %v1344
        %v1351 = vmul.f32 %v893, %v1344
        %v1352 = vmul.f32 %v894, %v1344
        %v1353 = vmul.f32 %v895, %v1344
        %v1354 = vmul.f32 %v896, %v1344
        %v1355 = vmul.f32 %v897, %v1344
        %v1356 = vmul.f32 %v898, %v1344
        %v1357 = vmul.f32 %v899, %v1344
        %v1358 = vmul.f32 %v900, %v1344
        %v1359 = vmul.f32 %v959, %v1344
        %v1360 = vmul.f32 %v960, %v1344
        %v1361 = vadd.f32 %v1325, %v1345
        %v1362 = vadd.f32 %v1326, %v1346
        %v1363 = vadd.f32 %v1327, %v1347
        %v1364 = vadd.f32 %v1328, %v1348
        %v1365 = vadd.f32 %v1329, %v1349
        %v1366 = vadd.f32 %v1330, %v1350
        %v1367 = vadd.f32 %v1331, %v1351
        %v1368 = vadd.f32 %v1332, %v1352
        %v1369 = vadd.f32 %v1333, %v1353
        %v1370 = vadd.f32 %v1334, %v1354
        %v1371 = vadd.f32 %v1335, %v1355
        %v1372 = vadd.f32 %v1336, %v1356
        %v1373 = vadd.f32 %v1337, %v1357
        %v1374 = vadd.f32 %v1338, %v1358
        %v1375 = vadd.f32 %v1339, %v1359
        %v1376 = vadd.f32 %v1340, %v1360
        %v1377 = vlaneseq
        %v1378 = vshrl.u32 %v1377, 7
        %v1379 = vsub.s32 0, %v1378
        %v1380 = vrot.slane %v1104, %v1379
        %v1381 = vmul.f32 %v1051, %v1380
        %v1382 = vmul.f32 %v1095, %v1380
        %v1383 = vmul.f32 %v1054, %v1380
        %v1384 = vmul.f32 %v1096, %v1380
        %v1385 = vmul.f32 %v1057, %v1380
        %v1386 = vmul.f32 %v1097, %v1380
        %v1387 = vmul.f32 %v1060, %v1380
        %v1388 = vmul.f32 %v1098, %v1380
        %v1389 = vmul.f32 %v1063, %v1380
        %v1390 = vmul.f32 %v1099, %v1380
        %v1391 = vmul.f32 %v1066, %v1380
        %v1392 = vmul.f32 %v1100, %v1380
        %v1393 = vmul.f32 %v1069, %v1380
        %v1394 = vmul.f32 %v1101, %v1380
        %v1395 = vmul.f32 %v1072, %v1380
        %v1396 = vmul.f32 %v1102, %v1380
        %v1397 = vadd.f32 %v1361, %v1381
        %v1398 = vadd.f32 %v1362, %v1382
        %v1399 = vadd.f32 %v1363, %v1383
        %v1400 = vadd.f32 %v1364, %v1384
        %v1401 = vadd.f32 %v1365, %v1385
        %v1402 = vadd.f32 %v1366, %v1386
        %v1403 = vadd.f32 %v1367, %v1387
        %v1404 = vadd.f32 %v1368, %v1388
        %v1405 = vadd.f32 %v1369, %v1389
        %v1406 = vadd.f32 %v1370, %v1390
        %v1407 = vadd.f32 %v1371, %v1391
        %v1408 = vadd.f32 %v1372, %v1392
        %v1409 = vadd.f32 %v1373, %v1393
        %v1410 = vadd.f32 %v1374, %v1394
        %v1411 = vadd.f32 %v1375, %v1395
        %v1412 = vadd.f32 %v1376, %v1396
        %v1413 = vld [vmem:[#allocation15] sm:$0xff]
        %v1414 = vld [vmem:[#allocation15 + $0x8] sm:$0xff]
        %v1415 = vld [vmem:[#allocation15 + $0x10] sm:$0xff]
        %v1416 = vld [vmem:[#allocation15 + $0x18] sm:$0xff]
        %v1417 = vld [vmem:[%s9] sm:$0x1]
        %v1419 = vlaneseq
        %v1420 = vshrl.u32 %v1419, 7
        %v1421 = vsub.s32 0, %v1420
        %v1422 = vrot.slane %v1417, %v1421
        %vm1424 = vcmask 261120
        %v1426 = vsel %vm1424, %v1397, 0
        %v1429 = vsel %vm1424, %v1398, 0
        %v1432 = vsel %vm1424, %v1399, 0
        %v1435 = vsel %vm1424, %v1400, 0
        %v1438 = vsel %vm1424, %v1401, 0
        %v1441 = vsel %vm1424, %v1402, 0
        %v1444 = vsel %vm1424, %v1403, 0
        %v1447 = vsel %vm1424, %v1404, 0
        %v1450 = vsel %vm1424, %v1405, 0
        %v1453 = vsel %vm1424, %v1406, 0
        %v1456 = vsel %vm1424, %v1407, 0
        %v1459 = vsel %vm1424, %v1408, 0
        %v1462 = vsel %vm1424, %v1409, 0
        %v1465 = vsel %vm1424, %v1410, 0
        %v1468 = vsel %vm1424, %v1411, 0
        %v1471 = vsel %vm1424, %v1412, 0
        %1473 = vmatprep.subr.mxu0 0.0
        %1474 = vmatpush1.msra.mxu0 %v1413
        %1475 = vmatprep.subr.mxu0 0.0
        %1476 = vmatpush1.msra.mxu0 %v1414
        %1477 = vmatprep.subr.mxu0 0.0
        %1478 = vmatpush1.msra.mxu0 %v1415
        %1479 = vmatprep.subr.mxu0 0.0
        %1480 = vmatpush1.msra.mxu0 %v1416
        %1481 = vmatprep.subr.mxu0 0.0
        %1482 = vmatpush1.msra.mxu0 0.0
        %1483 = vmatprep.subr.mxu0 0.0
        %1484 = vmatpush1.msra.mxu0 0.0
        %1485 = vmatprep.subr.mxu0 0.0
        %1486 = vmatpush1.msra.mxu0 0.0
        %1487 = vmatprep.subr.mxu0 0.0
        %1488 = vmatpush1.msra.mxu0 0.0
        %1489 = vmatprep.subr.mxu0 0.0
        %1490 = vmatpush1.msra.mxu0 0.0
        %1491 = vmatprep.subr.mxu0 0.0
        %1492 = vmatpush1.msra.mxu0 0.0
        %1493 = vmatprep.subr.mxu0 0.0
        %1494 = vmatpush1.msra.mxu0 0.0
        %1495 = vmatprep.subr.mxu0 0.0
        %1496 = vmatpush1.msra.mxu0 0.0
        %1497 = vmatprep.subr.mxu0 0.0
        %1498 = vmatpush1.msra.mxu0 0.0
        %1499 = vmatprep.subr.mxu0 0.0
        %1500 = vmatpush1.msra.mxu0 0.0
        %1501 = vmatprep.subr.mxu0 0.0
        %1502 = vmatpush1.msra.mxu0 0.0
        %1503 = vmatprep.subr.mxu0 0.0
        %1504 = vmatpush1.msra.mxu0 0.0
        %1505 = vmatprep.subr.mxu0 0.0
        %1506 = vmatpush1.msra.mxu0 0.0
        %1507 = vmatprep.subr.mxu0 0.0
        %1508 = vmatpush1.msra.mxu0 0.0
        %1509 = vmatprep.subr.mxu0 0.0
        %1510 = vmatpush1.msra.mxu0 0.0
        %1511 = vmatprep.subr.mxu0 0.0
        %1512 = vmatpush1.msra.mxu0 0.0
        %1513 = vmatprep.subr.mxu0 0.0
        %1514 = vmatpush1.msra.mxu0 0.0
        %1515 = vmatprep.subr.mxu0 0.0
        %1516 = vmatpush1.msra.mxu0 0.0
        %1517 = vmatprep.subr.mxu0 0.0
        %1518 = vmatpush1.msra.mxu0 0.0
        %1519 = vmatprep.subr.mxu0 0.0
        %1520 = vmatpush1.msra.mxu0 0.0
        %1521 = vmatprep.subr.mxu0 0.0
        %1522 = vmatpush1.msra.mxu0 0.0
        %1523 = vmatprep.subr.mxu0 0.0
        %1524 = vmatpush1.msra.mxu0 0.0
        %1525 = vmatprep.subr.mxu0 0.0
        %1526 = vmatpush1.msra.mxu0 0.0
        %1527 = vmatprep.subr.mxu0 0.0
        %1528 = vmatpush1.msra.mxu0 0.0
        %1529 = vmatprep.subr.mxu0 0.0
        %1530 = vmatpush1.msra.mxu0 0.0
        %1531 = vmatprep.subr.mxu0 0.0
        %1532 = vmatpush1.msra.mxu0 0.0
        %1533 = vmatprep.subr.mxu0 0.0
        %1534 = vmatpush1.msra.mxu0 0.0
        %1535 = vmatprep.subr.mxu0 0.0
        %1536 = vmatpush1.msra.mxu0 0.0
        %1537 = vmatprep.mubr.f32.mxu0 0.0
        %1538 = vmatmul.mubr.f32.gmra.mrb[0].mxu0 %v1426
        %v1539 = vpop.f32.mrb[0].mxu0
        %v1540 = vadd.f32 %v1422, %v1539
        %v1541 = vpop.f32.mrb[0].mxu0
        %1542 = vmatprep.mubr.f32.mxu0 0.0
        %1543 = vmatmul.mubr.f32.gmra.mrb[0].mxu0 %v1429
        %v1544 = vpop.f32.mrb[0].mxu0
        %v1545 = vadd.f32 %v1422, %v1544
        %v1546 = vpop.f32.mrb[0].mxu0
        %1547 = vmatprep.mubr.f32.mxu0 0.0
        %1548 = vmatmul.mubr.f32.gmra.mrb[0].mxu0 %v1432
        %v1549 = vpop.f32.mrb[0].mxu0
        %v1550 = vadd.f32 %v1422, %v1549
        %v1551 = vpop.f32.mrb[0].mxu0
        %1552 = vmatprep.mubr.f32.mxu0 0.0
        %1553 = vmatmul.mubr.f32.gmra.mrb[0].mxu0 %v1435
        %v1554 = vpop.f32.mrb[0].mxu0
        %v1555 = vadd.f32 %v1422, %v1554
        %v1556 = vpop.f32.mrb[0].mxu0
        %1557 = vmatprep.mubr.f32.mxu0 0.0
        %1558 = vmatmul.mubr.f32.gmra.mrb[0].mxu0 %v1438
        %v1559 = vpop.f32.mrb[0].mxu0
        %v1560 = vadd.f32 %v1422, %v1559
        %v1561 = vpop.f32.mrb[0].mxu0
        %1562 = vmatprep.mubr.f32.mxu0 0.0
        %1563 = vmatmul.mubr.f32.gmra.mrb[0].mxu0 %v1441
        %v1564 = vpop.f32.mrb[0].mxu0
        %v1565 = vadd.f32 %v1422, %v1564
        %v1566 = vpop.f32.mrb[0].mxu0
        %1567 = vmatprep.mubr.f32.mxu0 0.0
        %1568 = vmatmul.mubr.f32.gmra.mrb[0].mxu0 %v1444
        %v1569 = vpop.f32.mrb[0].mxu0
        %v1570 = vadd.f32 %v1422, %v1569
        %v1571 = vpop.f32.mrb[0].mxu0
        %1572 = vmatprep.mubr.f32.mxu0 0.0
        %1573 = vmatmul.mubr.f32.gmra.mrb[0].mxu0 %v1447
        %v1574 = vpop.f32.mrb[0].mxu0
        %v1575 = vadd.f32 %v1422, %v1574
        %v1576 = vpop.f32.mrb[0].mxu0
        %1577 = vmatprep.mubr.f32.mxu0 0.0
        %1578 = vmatmul.mubr.f32.gmra.mrb[0].mxu0 %v1450
        %v1579 = vpop.f32.mrb[0].mxu0
        %v1580 = vadd.f32 %v1422, %v1579
        %v1581 = vpop.f32.mrb[0].mxu0
        %1582 = vmatprep.mubr.f32.mxu0 0.0
        %1583 = vmatmul.mubr.f32.gmra.mrb[0].mxu0 %v1453
        %v1584 = vpop.f32.mrb[0].mxu0
        %v1585 = vadd.f32 %v1422, %v1584
        %v1586 = vpop.f32.mrb[0].mxu0
        %1587 = vmatprep.mubr.f32.mxu0 0.0
        %1588 = vmatmul.mubr.f32.gmra.mrb[0].mxu0 %v1456
        %v1589 = vpop.f32.mrb[0].mxu0
        %v1590 = vadd.f32 %v1422, %v1589
        %v1591 = vpop.f32.mrb[0].mxu0
        %1592 = vmatprep.mubr.f32.mxu0 0.0
        %1593 = vmatmul.mubr.f32.gmra.mrb[0].mxu0 %v1459
        %v1594 = vpop.f32.mrb[0].mxu0
        %v1595 = vadd.f32 %v1422, %v1594
        %v1596 = vpop.f32.mrb[0].mxu0
        %1597 = vmatprep.mubr.f32.mxu0 0.0
        %1598 = vmatmul.mubr.f32.gmra.mrb[0].mxu0 %v1462
        %v1599 = vpop.f32.mrb[0].mxu0
        %v1600 = vadd.f32 %v1422, %v1599
        %v1601 = vpop.f32.mrb[0].mxu0
        %1602 = vmatprep.mubr.f32.mxu0 0.0
        %1603 = vmatmul.mubr.f32.gmra.mrb[0].mxu0 %v1465
        %v1604 = vpop.f32.mrb[0].mxu0
        %v1605 = vadd.f32 %v1422, %v1604
        %v1606 = vpop.f32.mrb[0].mxu0
        %1607 = vmatprep.mubr.f32.mxu0 0.0
        %1608 = vmatmul.mubr.f32.gmra.mrb[0].mxu0 %v1468
        %v1609 = vpop.f32.mrb[0].mxu0
        %v1610 = vadd.f32 %v1422, %v1609
        %v1611 = vpop.f32.mrb[0].mxu0
        %1612 = vmatprep.mubr.f32.mxu0 0.0
        %1613 = vmatmul.mubr.f32.gmra.mrb[0].mxu0 %v1471
        %v1614 = vpop.f32.mrb[0].mxu0
        %v1615 = vadd.f32 %v1422, %v1614
        %v1616 = vpop.f32.mrb[0].mxu0
        %1617 = vdwg.mxu0
        %1618 = vst.msk [vmem:[%s685] sm:$0xff] %vm1424, %v1540
        %1619 = vst.msk [vmem:[%s685 + $0x8] sm:$0xff] %vm1424, %v1545
        %1620 = vst.msk [vmem:[%s685 + $0x10] sm:$0xff] %vm1424, %v1550
        %1621 = vst.msk [vmem:[%s685 + $0x18] sm:$0xff] %vm1424, %v1555
        %1622 = vst.msk [vmem:[%s685 + $0x20] sm:$0xff] %vm1424, %v1560
        %1623 = vst.msk [vmem:[%s685 + $0x28] sm:$0xff] %vm1424, %v1565
        %1624 = vst.msk [vmem:[%s685 + $0x30] sm:$0xff] %vm1424, %v1570
        %1625 = vst.msk [vmem:[%s685 + $0x38] sm:$0xff] %vm1424, %v1575
        %1626 = vst.msk [vmem:[%s685 + $0x40] sm:$0xff] %vm1424, %v1580
        %1627 = vst.msk [vmem:[%s685 + $0x48] sm:$0xff] %vm1424, %v1585
        %1628 = vst.msk [vmem:[%s685 + $0x50] sm:$0xff] %vm1424, %v1590
        %1629 = vst.msk [vmem:[%s685 + $0x58] sm:$0xff] %vm1424, %v1595
        %1630 = vst.msk [vmem:[%s685 + $0x60] sm:$0xff] %vm1424, %v1600
        %1631 = vst.msk [vmem:[%s685 + $0x68] sm:$0xff] %vm1424, %v1605
        %1632 = vst.msk [vmem:[%s685 + $0x70] sm:$0xff] %vm1424, %v1610
        %1633 = vst.msk [vmem:[%s685 + $0x78] sm:$0xff] %vm1424, %v1615
        %s1634 = sand.u32 %s343, 1
        %s1635 = scalar_lea.sflag [#allocation4], %s1634
        %s1636 = sand.u32 %s343, 1
        %s1637 = smul.addr %s1636, 128
        %s1638 = scalar_lea.vmem [#allocation16], %s1637
        // Predicated region
        $region93: #{tpu_custom_call.1} parent=59 // pred_check
          %p1639 = pneg %p353
        $region94: #{tpu_custom_call.1} parent=59 // pred_check_branch
          %1641 = sbr.rel (%p1639) target = $region96
        $region95: #{tpu_custom_call.1} parent=59 // pred_region
          %s1642 = smul.u32 8, %s42
          %s1644 = ssub.s32 2048, 2048
          %1645 = vsyncadd %s1635, %s1644
          %s1646 = smul.addr %s1642, 2
          %s1647 = smul.addr %s41, 32
          %s1648 = sadd.s32 %s1646, %s1647
          %s1649 = smul.addr %s1648, 128
          %s1650 = scalar_lea.hbm %s10, %s1649
          %s1651 = sshll.u32 %s1638, 4
          %s1652 = int_to_ptr.vmem [resolvable:$true] %s1651
          %1657 = dma.vmem_to_hbm [thread:$0]  %s1652, 2048, %s1650, %s1635, 128, 128, 8
        $region96: #{tpu_custom_call.1} parent=59 // pred_fallthru
          _
      $region60: #{tpu_custom_call.1} parent=5 // pred_fallthru
        _
      %p1658 = scmp.le.s32.totalorder 2, %s32
      // Predicated region
      $region97: #{tpu_custom_call.1} parent=5 // pred_check
        %p1659 = pneg %p1658
      $region98: #{tpu_custom_call.1} parent=5 // pred_check_branch
        %1661 = sbr.rel (%p1659) target = $region100
      $region99: #{tpu_custom_call.1} parent=5 // pred_region
        %s1662 = ssub.s32 %s32, 2
        // Predicated region
        $region101: #{tpu_custom_call.1} parent=99 // pred_check
          %p1663 = pneg %p359
        $region102: #{tpu_custom_call.1} parent=99 // pred_check_branch
          %1665 = sbr.rel (%p1663) target = $region104
        $region103: #{tpu_custom_call.1} parent=99 // pred_region
          %s1666 = sand.u32 %s344, 1
          %s1667 = scalar_lea.sflag [#allocation4], %s1666
          %s1668 = sand.u32 %s344, 1
          %s1669 = smul.addr %s1668, 128
          %s1670 = scalar_lea.vmem [#allocation16], %s1669
          %1671 = dma.done %s1667, 2048
        $region104: #{tpu_custom_call.1} parent=99 // pred_fallthru
          _
      $region100: #{tpu_custom_call.1} parent=5 // pred_fallthru
        _
    $region6: #{tpu_custom_call.1} parent=1 // loop_footer
      %s36 = sadd.s32 1, %s32
    $region7: #{tpu_custom_call.1} parent=1 // loop_footer_branch
      %31 = sbr.rel target = $region3
    $region8: #{tpu_custom_call.1} parent=1 // loop_exit
      _
    %1672 = vsyncpa [#allocation3], 1
    %s1673 = scalar_lea.sflag [#allocation3], 1
    %1674 = vsyncpa %s1673, 1
    %1675 = vsyncpa [#allocation8], 1
    %s1676 = scalar_lea.sflag [#allocation8], 1
    %1677 = vsyncpa %s1676, 1
    %1678 = vsyncpa [#allocation11], 1
    %s1679 = scalar_lea.sflag [#allocation11], 1
    %1680 = vsyncpa %s1679, 1
    %1681 = vsyncpa [#allocation14], 1
    %s1682 = scalar_lea.sflag [#allocation14], 1
    %1683 = vsyncpa %s1682, 1
    %1684 = vsyncpa [#allocation4], 1
    %s1685 = scalar_lea.sflag [#allocation4], 1
    %1686 = vsyncpa %s1685, 1
    %1687 = vsyncpa [#allocation5], 1
    %s1688 = scalar_lea.sflag [#allocation5], 1
    %1689 = vsyncpa %s1688, 1

</llo_original>
